<compile_context>
chip_gen: v6e
topology: v6e:2x2x1
jax: 0.10.0
libtpu: 0.0.40
codegen_flags: <defaults>
</compile_context>

<pallas_src>
import jax
import jax.numpy as jnp
from jax import lax
from jax.experimental import pallas as pl
from jax.experimental.pallas import tpu as pltpu

NEG_SLOPE = 0.01  # nn.LeakyReLU() default negative_slope


def _pick_row_tile(H, W, row_target):
    """Largest TH <= row_target/W with TH | H and TH*W a multiple of 128 (else TH=H)."""
    th = max(1, min(H, row_target // max(W, 1)))
    while th > 1 and not (H % th == 0 and (th * W) % 128 == 0):
        th -= 1
    if not (H % th == 0 and ((th * W) % 128 == 0 or th == H)):
        th = H
    return th


def _upblock_kernel(xpad_ref, w_ref, b_ref, out_ref):
    # xpad_ref: (H+2, W+2, Cin)      bf16  zero-padded image of batch element n
    # w_ref:    (4, Cout, 4*Cin)     bf16  per-phase fused + transposed 2x2 taps
    # b_ref:    (Cout, 1)            f32   bias (column vector)
    # out_ref:  (2, 2, Cout, TH*W)   f32   phase-major output rows for this tile
    h = pl.program_id(1)
    _, Wp2, Cin = xpad_ref.shape
    W = Wp2 - 2
    rows = out_ref.shape[-1]
    TH = rows // W
    row0 = pl.multiple_of(h * TH, TH)

    # The 9 shifted (TH, W, Cin) windows, flattened to (rows, Cin).  Each phase uses a
    # 2x2 subset of them, so build them once and share across the 4 phases.
    shifted = []
    for a in range(3):
        row_slices = []
        for b in range(3):
            sl = xpad_ref[pl.ds(row0 + a, TH), pl.ds(b, W), :]       # (TH, W, Cin)
            row_slices.append(sl.reshape(rows, Cin))
        shifted.append(row_slices)

    bias = b_ref[...]                                                # (Cout, 1)
    for r in range(2):
        for s in range(2):
            # im2col: fuse the 2x2 taps into a single K = 4*Cin matmul
            # (one MXU push chain instead of four tiny K=Cin matmuls).
            patch = jnp.concatenate(
                [shifted[r + dh][s + dw] for dh in range(2) for dw in range(2)],
                axis=-1)                                             # (rows, 4*Cin) bf16
            w_p = w_ref[2 * r + s]                                   # (Cout, 4*Cin) bf16
            # (Cout, K) x (rows, K)^T -> (Cout, rows): spatial stays the lane dim.
            acc = lax.dot_general(
                w_p, patch,
                dimension_numbers=(((1,), (1,)), ((), ())),
                preferred_element_type=jnp.float32)                  # (Cout, rows) f32
            acc = acc + bias
            acc = jnp.where(acc >= 0, acc, NEG_SLOPE * acc)          # LeakyReLU (VPU)
            out_ref[r, s] = acc


def upblock_forward(x_nchw, w_pt, bias, *, row_target=512):
    """ConvTranspose2d(k=4, s=2, p=1) + LeakyReLU.

    x_nchw: (N, Cin, H, W) f32; w_pt: (Cin, Cout, 4, 4) f32 (PyTorch layout);
    bias: (Cout,) f32.  Returns (N, Cout, 2H, 2W) f32.
    """
    N, Cin, H, W = x_nchw.shape
    Cout = w_pt.shape[1]
    TH = _pick_row_tile(H, W, row_target)
    n_h = H // TH
    rows = TH * W

    # NCHW -> NHWC, bf16 cast, zero-pad by 1 (XLA fuses these into ~one copy).
    # TODO(synk): in an NHWC end-to-end pipeline these edge transposes disappear.
    x_nhwc = jnp.transpose(x_nchw, (0, 2, 3, 1)).astype(jnp.bfloat16)
    xpad = jnp.pad(x_nhwc, ((0, 0), (1, 1), (1, 1), (0, 0)))

    # Per-phase fused sub-kernels, transposed to (Cout, 4*Cin) with the K axis ordered
    # (dh, dw, ci) to match the kernel's im2col concat order.
    per_phase = []
    for r in range(2):
        for s in range(2):
            taps = [w_pt[:, :, 3 - r - 2 * dh, 3 - s - 2 * dw]        # (Cin, Cout)
                    for dh in range(2) for dw in range(2)]
            wp = jnp.stack(taps, axis=0)                              # (4, Cin, Cout)
            per_phase.append(jnp.transpose(wp, (2, 0, 1)).reshape(Cout, 4 * Cin))
    wsub_t = jnp.stack(per_phase, axis=0).astype(jnp.bfloat16)        # (4, Cout, 4*Cin)
    bias_col = bias.reshape(Cout, 1).astype(jnp.float32)

    flops = int(2 * N * H * W * 4 * (4 * Cin) * Cout)
    bytes_accessed = int(xpad.size * 2 + wsub_t.size * 2 + bias_col.size * 4
                         + 4 * N * H * W * Cout * 4)

    phases = pl.pallas_call(
        _upblock_kernel,
        out_shape=jax.ShapeDtypeStruct((2, 2, N, Cout, H * W), jnp.float32),
        grid_spec=pltpu.PrefetchScalarGridSpec(
            num_scalar_prefetch=0,
            grid=(N, n_h),
            in_specs=[
                pl.BlockSpec((None, H + 2, W + 2, Cin), lambda n, h: (n, 0, 0, 0)),
                pl.BlockSpec((4, Cout, 4 * Cin), lambda n, h: (0, 0, 0)),
                pl.BlockSpec((Cout, 1), lambda n, h: (0, 0)),
            ],
            out_specs=pl.BlockSpec((2, 2, None, Cout, rows),
                                   lambda n, h: (0, 0, n, 0, h)),
        ),
        compiler_params=pltpu.CompilerParams(
            dimension_semantics=("parallel", "parallel"),
            vmem_limit_bytes=32 * 1024 * 1024,
        ),
        cost_estimate=pl.CostEstimate(
            flops=flops, transcendentals=0, bytes_accessed=bytes_accessed),
    )(xpad, wsub_t, bias_col)

    # Fold phase interleave + ->NCHW into ONE transpose (single HBM pass):
    #   out[n, co, 2i+r, 2j+s] = phases[r, s, n, co, i*W + j]
    ph6 = phases.reshape(2, 2, N, Cout, H, W)
    out = jnp.transpose(ph6, (2, 3, 4, 0, 5, 1)).reshape(N, Cout, 2 * H, 2 * W)
    return out


def upblock_reference(x_nchw, w_pt, bias):
    """Pure-JAX reference: transposed conv via lhs-dilated convolution."""
    x = jnp.transpose(x_nchw, (0, 2, 3, 1))
    w_hwio = jnp.transpose(w_pt, (2, 3, 0, 1))[::-1, ::-1, :, :]      # flip + HWIO
    y = lax.conv_general_dilated(
        x, w_hwio, window_strides=(1, 1), padding=[(2, 2), (2, 2)],
        lhs_dilation=(2, 2), dimension_numbers=('NHWC', 'HWIO', 'NHWC'),
        precision=lax.Precision.HIGHEST) + bias
    y = jnp.where(y >= 0, y, NEG_SLOPE * y)
    return jnp.transpose(y, (0, 3, 1, 2))


if __name__ == "__main__":
    key = jax.random.PRNGKey(0)
    k1, k2, k3 = jax.random.split(key, 3)

    N, Cin, Cout, H, W = 2, 4, 8, 16, 16          # UpBlock(4, 8) at small spatial size
    x = jax.random.normal(k1, (N, Cin, H, W), jnp.float32)
    w = jax.random.normal(k2, (Cin, Cout, 4, 4), jnp.float32) * 0.1   # (in, out, 4, 4)
    b = jax.random.normal(k3, (Cout,), jnp.float32) * 0.1

    # Round x / w to bf16-representable values so the bf16 kernel and the f32 reference
    # see identical inputs (kernel still accumulates in f32 -> tight tolerance holds).
    x = x.astype(jnp.bfloat16).astype(jnp.float32)
    w = w.astype(jnp.bfloat16).astype(jnp.float32)

    ref = upblock_reference(x, w, b)
    for row_target in (512, 128):                 # single-tile and multi-tile row paths
        out = jax.block_until_ready(upblock_forward(x, w, b, row_target=row_target))
        assert out.shape == (N, Cout, 2 * H, 2 * W), out.shape
        err = float(jnp.max(jnp.abs(out - ref)))
        assert jnp.allclose(out, ref, atol=1e-3, rtol=1e-3), err
    print("KERNEL_OK")
</pallas_src>

<mosaic_0001>
module attributes {stable_mosaic.version = 11 : i64} {
  func.func @_upblock_kernel(%arg0: i32, %arg1: i32, %arg2: memref<1x18x18x4xbf16, #tpu.memory_space<vmem>>, %arg3: memref<4x8x16xbf16, #tpu.memory_space<vmem>>, %arg4: memref<8x1xf32, #tpu.memory_space<vmem>>, %arg5: memref<2x2x1x8x256xf32, #tpu.memory_space<vmem>>) attributes {dimension_semantics = [#tpu.dimension_semantics<parallel>, #tpu.dimension_semantics<parallel>], iteration_bounds = array<i64: 2, 1>, scalar_prefetch = 0 : i64, scratch_operands = 0 : i64, tpu.core_type = #tpu.core_type<tc>, window_params = [{transform_indices = @transform_0, window_bounds = array<i64: 1, 18, 18, 4>}, {pipeline_mode = #tpu.pipeline_mode<synchronous>, transform_indices = @transform_1, window_bounds = array<i64: 4, 8, 16>}, {pipeline_mode = #tpu.pipeline_mode<synchronous>, transform_indices = @transform_2, window_bounds = array<i64: 8, 1>}, {transform_indices = @transform_3, window_bounds = array<i64: 2, 2, 1, 8, 256>}]} {
    %c16_i32 = arith.constant 16 : i32
    %0 = arith.muli %arg1, %c16_i32 : i32
    %1 = tpu.assume_multiple %0, 16 : i32
    %c0_i32 = arith.constant 0 : i32
    %2 = arith.addi %1, %c0_i32 : i32
    %c0 = arith.constant 0 : index
    %3 = arith.index_cast %2 : i32 to index
    %c0_0 = arith.constant 0 : index
    %c0_1 = arith.constant 0 : index
    %4 = vector.load %arg2[%c0, %3, %c0_0, %c0_1] : memref<1x18x18x4xbf16, #tpu.memory_space<vmem>>, vector<1x16x16x4xbf16>
    %5 = vector.shape_cast %4 : vector<1x16x16x4xbf16> to vector<16x16x4xbf16>
    %6 = vector.shape_cast %5 : vector<16x16x4xbf16> to vector<256x4xbf16>
    %c0_i32_2 = arith.constant 0 : i32
    %7 = arith.addi %1, %c0_i32_2 : i32
    %c0_3 = arith.constant 0 : index
    %8 = arith.index_cast %7 : i32 to index
    %c1 = arith.constant 1 : index
    %c0_4 = arith.constant 0 : index
    %9 = vector.load %arg2[%c0_3, %8, %c1, %c0_4] : memref<1x18x18x4xbf16, #tpu.memory_space<vmem>>, vector<1x16x16x4xbf16>
    %10 = vector.shape_cast %9 : vector<1x16x16x4xbf16> to vector<16x16x4xbf16>
    %11 = vector.shape_cast %10 : vector<16x16x4xbf16> to vector<256x4xbf16>
    %c0_i32_5 = arith.constant 0 : i32
    %12 = arith.addi %1, %c0_i32_5 : i32
    %c0_6 = arith.constant 0 : index
    %13 = arith.index_cast %12 : i32 to index
    %c2 = arith.constant 2 : index
    %c0_7 = arith.constant 0 : index
    %14 = vector.load %arg2[%c0_6, %13, %c2, %c0_7] : memref<1x18x18x4xbf16, #tpu.memory_space<vmem>>, vector<1x16x16x4xbf16>
    %15 = vector.shape_cast %14 : vector<1x16x16x4xbf16> to vector<16x16x4xbf16>
    %16 = vector.shape_cast %15 : vector<16x16x4xbf16> to vector<256x4xbf16>
    %c1_i32 = arith.constant 1 : i32
    %17 = arith.addi %1, %c1_i32 : i32
    %c0_8 = arith.constant 0 : index
    %18 = arith.index_cast %17 : i32 to index
    %c0_9 = arith.constant 0 : index
    %c0_10 = arith.constant 0 : index
    %19 = vector.load %arg2[%c0_8, %18, %c0_9, %c0_10] : memref<1x18x18x4xbf16, #tpu.memory_space<vmem>>, vector<1x16x16x4xbf16>
    %20 = vector.shape_cast %19 : vector<1x16x16x4xbf16> to vector<16x16x4xbf16>
    %21 = vector.shape_cast %20 : vector<16x16x4xbf16> to vector<256x4xbf16>
    %c1_i32_11 = arith.constant 1 : i32
    %22 = arith.addi %1, %c1_i32_11 : i32
    %c0_12 = arith.constant 0 : index
    %23 = arith.index_cast %22 : i32 to index
    %c1_13 = arith.constant 1 : index
    %c0_14 = arith.constant 0 : index
    %24 = vector.load %arg2[%c0_12, %23, %c1_13, %c0_14] : memref<1x18x18x4xbf16, #tpu.memory_space<vmem>>, vector<1x16x16x4xbf16>
    %25 = vector.shape_cast %24 : vector<1x16x16x4xbf16> to vector<16x16x4xbf16>
    %26 = vector.shape_cast %25 : vector<16x16x4xbf16> to vector<256x4xbf16>
    %c1_i32_15 = arith.constant 1 : i32
    %27 = arith.addi %1, %c1_i32_15 : i32
    %c0_16 = arith.constant 0 : index
    %28 = arith.index_cast %27 : i32 to index
    %c2_17 = arith.constant 2 : index
    %c0_18 = arith.constant 0 : index
    %29 = vector.load %arg2[%c0_16, %28, %c2_17, %c0_18] : memref<1x18x18x4xbf16, #tpu.memory_space<vmem>>, vector<1x16x16x4xbf16>
    %30 = vector.shape_cast %29 : vector<1x16x16x4xbf16> to vector<16x16x4xbf16>
    %31 = vector.shape_cast %30 : vector<16x16x4xbf16> to vector<256x4xbf16>
    %c2_i32 = arith.constant 2 : i32
    %32 = arith.addi %1, %c2_i32 : i32
    %c0_19 = arith.constant 0 : index
    %33 = arith.index_cast %32 : i32 to index
    %c0_20 = arith.constant 0 : index
    %c0_21 = arith.constant 0 : index
    %34 = vector.load %arg2[%c0_19, %33, %c0_20, %c0_21] : memref<1x18x18x4xbf16, #tpu.memory_space<vmem>>, vector<1x16x16x4xbf16>
    %35 = vector.shape_cast %34 : vector<1x16x16x4xbf16> to vector<16x16x4xbf16>
    %36 = vector.shape_cast %35 : vector<16x16x4xbf16> to vector<256x4xbf16>
    %c2_i32_22 = arith.constant 2 : i32
    %37 = arith.addi %1, %c2_i32_22 : i32
    %c0_23 = arith.constant 0 : index
    %38 = arith.index_cast %37 : i32 to index
    %c1_24 = arith.constant 1 : index
    %c0_25 = arith.constant 0 : index
    %39 = vector.load %arg2[%c0_23, %38, %c1_24, %c0_25] : memref<1x18x18x4xbf16, #tpu.memory_space<vmem>>, vector<1x16x16x4xbf16>
    %40 = vector.shape_cast %39 : vector<1x16x16x4xbf16> to vector<16x16x4xbf16>
    %41 = vector.shape_cast %40 : vector<16x16x4xbf16> to vector<256x4xbf16>
    %c2_i32_26 = arith.constant 2 : i32
    %42 = arith.addi %1, %c2_i32_26 : i32
    %c0_27 = arith.constant 0 : index
    %43 = arith.index_cast %42 : i32 to index
    %c2_28 = arith.constant 2 : index
    %c0_29 = arith.constant 0 : index
    %44 = vector.load %arg2[%c0_27, %43, %c2_28, %c0_29] : memref<1x18x18x4xbf16, #tpu.memory_space<vmem>>, vector<1x16x16x4xbf16>
    %45 = vector.shape_cast %44 : vector<1x16x16x4xbf16> to vector<16x16x4xbf16>
    %46 = vector.shape_cast %45 : vector<16x16x4xbf16> to vector<256x4xbf16>
    %c0_30 = arith.constant 0 : index
    %c0_31 = arith.constant 0 : index
    %47 = vector.load %arg4[%c0_30, %c0_31] : memref<8x1xf32, #tpu.memory_space<vmem>>, vector<8x1xf32>
    %48 = tpu.concatenate %6, %11, %21, %26 in 1 : vector<256x4xbf16>, vector<256x4xbf16>, vector<256x4xbf16>, vector<256x4xbf16> -> vector<256x16xbf16>
    %c0_32 = arith.constant 0 : index
    %c0_33 = arith.constant 0 : index
    %c0_34 = arith.constant 0 : index
    %49 = vector.load %arg3[%c0_32, %c0_33, %c0_34] : memref<4x8x16xbf16, #tpu.memory_space<vmem>>, vector<1x8x16xbf16>
    %50 = vector.shape_cast %49 : vector<1x8x16xbf16> to vector<8x16xbf16>
    %cst = arith.constant dense<0.000000e+00> : vector<8x256xf32>
    %51 = tpu.matmul %50, %48, %cst {dimension_numbers = #tpu.dot_dimension_numbers<[1], [1], [0], [0], [0, 0, 1, 0], [], []>} : vector<8x16xbf16>, vector<256x16xbf16>, vector<8x256xf32> -> vector<8x256xf32>
    %52 = vector.broadcast %47 : vector<8x1xf32> to vector<8x256xf32>
    %53 = arith.addf %51, %52 : vector<8x256xf32>
    %cst_35 = arith.constant 0.000000e+00 : f32
    %54 = vector.broadcast %cst_35 : f32 to vector<8x256xf32>
    %55 = arith.cmpf oge, %53, %54 : vector<8x256xf32>
    %cst_36 = arith.constant 0.00999999977 : f32
    %56 = vector.broadcast %cst_36 : f32 to vector<8x256xf32>
    %57 = arith.mulf %56, %53 : vector<8x256xf32>
    %58 = arith.select %55, %53, %57 : vector<8x256xi1>, vector<8x256xf32>
    %c0_37 = arith.constant 0 : index
    %c0_38 = arith.constant 0 : index
    %c0_39 = arith.constant 0 : index
    %c0_40 = arith.constant 0 : index
    %c0_41 = arith.constant 0 : index
    %59 = vector.load %arg5[%c0_37, %c0_38, %c0_39, %c0_40, %c0_41] : memref<2x2x1x8x256xf32, #tpu.memory_space<vmem>>, vector<1x1x1x8x256xf32>
    %60 = vector.shape_cast %59 : vector<1x1x1x8x256xf32> to vector<8x256xf32>
    %61 = vector.shape_cast %58 : vector<8x256xf32> to vector<1x1x1x8x256xf32>
    tpu.vector_store %arg5[%c0_37, %c0_38, %c0_39, %c0_40, %c0_41], %61 {strides = array<i32>} : memref<2x2x1x8x256xf32, #tpu.memory_space<vmem>>, vector<1x1x1x8x256xf32>,
    %62 = tpu.concatenate %11, %16, %26, %31 in 1 : vector<256x4xbf16>, vector<256x4xbf16>, vector<256x4xbf16>, vector<256x4xbf16> -> vector<256x16xbf16>
    %c1_42 = arith.constant 1 : index
    %c0_43 = arith.constant 0 : index
    %c0_44 = arith.constant 0 : index
    %63 = vector.load %arg3[%c1_42, %c0_43, %c0_44] : memref<4x8x16xbf16, #tpu.memory_space<vmem>>, vector<1x8x16xbf16>
    %64 = vector.shape_cast %63 : vector<1x8x16xbf16> to vector<8x16xbf16>
    %cst_45 = arith.constant dense<0.000000e+00> : vector<8x256xf32>
    %65 = tpu.matmul %64, %62, %cst_45 {dimension_numbers = #tpu.dot_dimension_numbers<[1], [1], [0], [0], [0, 0, 1, 0], [], []>} : vector<8x16xbf16>, vector<256x16xbf16>, vector<8x256xf32> -> vector<8x256xf32>
    %66 = vector.broadcast %47 : vector<8x1xf32> to vector<8x256xf32>
    %67 = arith.addf %65, %66 : vector<8x256xf32>
    %cst_46 = arith.constant 0.000000e+00 : f32
    %68 = vector.broadcast %cst_46 : f32 to vector<8x256xf32>
    %69 = arith.cmpf oge, %67, %68 : vector<8x256xf32>
    %cst_47 = arith.constant 0.00999999977 : f32
    %70 = vector.broadcast %cst_47 : f32 to vector<8x256xf32>
    %71 = arith.mulf %70, %67 : vector<8x256xf32>
    %72 = arith.select %69, %67, %71 : vector<8x256xi1>, vector<8x256xf32>
    %c0_48 = arith.constant 0 : index
    %c1_49 = arith.constant 1 : index
    %c0_50 = arith.constant 0 : index
    %c0_51 = arith.constant 0 : index
    %c0_52 = arith.constant 0 : index
    %73 = vector.load %arg5[%c0_48, %c1_49, %c0_50, %c0_51, %c0_52] : memref<2x2x1x8x256xf32, #tpu.memory_space<vmem>>, vector<1x1x1x8x256xf32>
    %74 = vector.shape_cast %73 : vector<1x1x1x8x256xf32> to vector<8x256xf32>
    %75 = vector.shape_cast %72 : vector<8x256xf32> to vector<1x1x1x8x256xf32>
    tpu.vector_store %arg5[%c0_48, %c1_49, %c0_50, %c0_51, %c0_52], %75 {strides = array<i32>} : memref<2x2x1x8x256xf32, #tpu.memory_space<vmem>>, vector<1x1x1x8x256xf32>,
    %76 = tpu.concatenate %21, %26, %36, %41 in 1 : vector<256x4xbf16>, vector<256x4xbf16>, vector<256x4xbf16>, vector<256x4xbf16> -> vector<256x16xbf16>
    %c2_53 = arith.constant 2 : index
    %c0_54 = arith.constant 0 : index
    %c0_55 = arith.constant 0 : index
    %77 = vector.load %arg3[%c2_53, %c0_54, %c0_55] : memref<4x8x16xbf16, #tpu.memory_space<vmem>>, vector<1x8x16xbf16>
    %78 = vector.shape_cast %77 : vector<1x8x16xbf16> to vector<8x16xbf16>
    %cst_56 = arith.constant dense<0.000000e+00> : vector<8x256xf32>
    %79 = tpu.matmul %78, %76, %cst_56 {dimension_numbers = #tpu.dot_dimension_numbers<[1], [1], [0], [0], [0, 0, 1, 0], [], []>} : vector<8x16xbf16>, vector<256x16xbf16>, vector<8x256xf32> -> vector<8x256xf32>
    %80 = vector.broadcast %47 : vector<8x1xf32> to vector<8x256xf32>
    %81 = arith.addf %79, %80 : vector<8x256xf32>
    %cst_57 = arith.constant 0.000000e+00 : f32
    %82 = vector.broadcast %cst_57 : f32 to vector<8x256xf32>
    %83 = arith.cmpf oge, %81, %82 : vector<8x256xf32>
    %cst_58 = arith.constant 0.00999999977 : f32
    %84 = vector.broadcast %cst_58 : f32 to vector<8x256xf32>
    %85 = arith.mulf %84, %81 : vector<8x256xf32>
    %86 = arith.select %83, %81, %85 : vector<8x256xi1>, vector<8x256xf32>
    %c1_59 = arith.constant 1 : index
    %c0_60 = arith.constant 0 : index
    %c0_61 = arith.constant 0 : index
    %c0_62 = arith.constant 0 : index
    %c0_63 = arith.constant 0 : index
    %87 = vector.load %arg5[%c1_59, %c0_60, %c0_61, %c0_62, %c0_63] : memref<2x2x1x8x256xf32, #tpu.memory_space<vmem>>, vector<1x1x1x8x256xf32>
    %88 = vector.shape_cast %87 : vector<1x1x1x8x256xf32> to vector<8x256xf32>
    %89 = vector.shape_cast %86 : vector<8x256xf32> to vector<1x1x1x8x256xf32>
    tpu.vector_store %arg5[%c1_59, %c0_60, %c0_61, %c0_62, %c0_63], %89 {strides = array<i32>} : memref<2x2x1x8x256xf32, #tpu.memory_space<vmem>>, vector<1x1x1x8x256xf32>,
    %90 = tpu.concatenate %26, %31, %41, %46 in 1 : vector<256x4xbf16>, vector<256x4xbf16>, vector<256x4xbf16>, vector<256x4xbf16> -> vector<256x16xbf16>
    %c3 = arith.constant 3 : index
    %c0_64 = arith.constant 0 : index
    %c0_65 = arith.constant 0 : index
    %91 = vector.load %arg3[%c3, %c0_64, %c0_65] : memref<4x8x16xbf16, #tpu.memory_space<vmem>>, vector<1x8x16xbf16>
    %92 = vector.shape_cast %91 : vector<1x8x16xbf16> to vector<8x16xbf16>
    %cst_66 = arith.constant dense<0.000000e+00> : vector<8x256xf32>
    %93 = tpu.matmul %92, %90, %cst_66 {dimension_numbers = #tpu.dot_dimension_numbers<[1], [1], [0], [0], [0, 0, 1, 0], [], []>} : vector<8x16xbf16>, vector<256x16xbf16>, vector<8x256xf32> -> vector<8x256xf32>
    %94 = vector.broadcast %47 : vector<8x1xf32> to vector<8x256xf32>
    %95 = arith.addf %93, %94 : vector<8x256xf32>
    %cst_67 = arith.constant 0.000000e+00 : f32
    %96 = vector.broadcast %cst_67 : f32 to vector<8x256xf32>
    %97 = arith.cmpf oge, %95, %96 : vector<8x256xf32>
    %cst_68 = arith.constant 0.00999999977 : f32
    %98 = vector.broadcast %cst_68 : f32 to vector<8x256xf32>
    %99 = arith.mulf %98, %95 : vector<8x256xf32>
    %100 = arith.select %97, %95, %99 : vector<8x256xi1>, vector<8x256xf32>
    %c1_69 = arith.constant 1 : index
    %c1_70 = arith.constant 1 : index
    %c0_71 = arith.constant 0 : index
    %c0_72 = arith.constant 0 : index
    %c0_73 = arith.constant 0 : index
    %101 = vector.load %arg5[%c1_69, %c1_70, %c0_71, %c0_72, %c0_73] : memref<2x2x1x8x256xf32, #tpu.memory_space<vmem>>, vector<1x1x1x8x256xf32>
    %102 = vector.shape_cast %101 : vector<1x1x1x8x256xf32> to vector<8x256xf32>
    %103 = vector.shape_cast %100 : vector<8x256xf32> to vector<1x1x1x8x256xf32>
    tpu.vector_store %arg5[%c1_69, %c1_70, %c0_71, %c0_72, %c0_73], %103 {strides = array<i32>} : memref<2x2x1x8x256xf32, #tpu.memory_space<vmem>>, vector<1x1x1x8x256xf32>,
    return
  }
  func.func @transform_0(%arg0: i32, %arg1: i32) -> (i32, i32, i32, i32) {
    %c0_i32 = arith.constant 0 : i32
    %c0_i32_0 = arith.constant 0 : i32
    %c0_i32_1 = arith.constant 0 : i32
    %c0_i32_2 = arith.constant 0 : i32
    return %arg0, %c0_i32, %c0_i32_0, %c0_i32_1 : i32, i32, i32, i32
  }
  func.func @transform_1(%arg0: i32, %arg1: i32) -> (i32, i32, i32) {
    %c0_i32 = arith.constant 0 : i32
    %c0_i32_0 = arith.constant 0 : i32
    %c0_i32_1 = arith.constant 0 : i32
    %c0_i32_2 = arith.constant 0 : i32
    return %c0_i32, %c0_i32_0, %c0_i32_1 : i32, i32, i32
  }
  func.func @transform_2(%arg0: i32, %arg1: i32) -> (i32, i32) {
    %c0_i32 = arith.constant 0 : i32
    %c0_i32_0 = arith.constant 0 : i32
    %c0_i32_1 = arith.constant 0 : i32
    return %c0_i32, %c0_i32_0 : i32, i32
  }
  func.func @transform_3(%arg0: i32, %arg1: i32) -> (i32, i32, i32, i32, i32) {
    %c0_i32 = arith.constant 0 : i32
    %c0_i32_0 = arith.constant 0 : i32
    %c0_i32_1 = arith.constant 0 : i32
    %c0_i32_2 = arith.constant 0 : i32
    return %c0_i32, %c0_i32_0, %arg0, %c0_i32_1, %arg1 : i32, i32, i32, i32, i32
  }
}

</mosaic_0001>

<llo_original>
// kernel: tpu_custom_call.1
$region0: #{tpu_custom_call.1}
  #allocation0 [shape = 'u32[]', space=smem, size = 0x4, offset = 0x4, fixed_abs, tag = 'smem constant byte address 0x4 - core index']
  #allocation1 [shape = 'u32[144,128]{1,0:T(1,128)}', space=vmem, size = 0x12000, scoped, tag = 'internal scratch']
  %s0 = inlined_call_operand.vmem [shape: bf16[2,18,18,4], index: 0, kind: input, shape index: {}]
  %s1 = inlined_call_operand.vmem [shape: bf16[4,8,16], index: 1, kind: input, shape index: {}]
  %s2 = inlined_call_operand.vmem [shape: f32[8,1], index: 2, kind: input, shape index: {}]
  %s3 = inlined_call_operand.hbm [shape: f32[2,2,2,8,256], index: 3, kind: output, shape index: {}]
  %s4 = sld [smem:[#allocation0]]
  $region45: #{tpu_custom_call.1} parent=0
    _
  %s6 = ssub.s32 1, %s4
  %s7 = scalar_select 0, %s6, %s4
  $region1: #{tpu_custom_call.1} parent=0
    #allocation2 [shape = 'u8[65536]{0}', space=vmem, size = 0x10000, scoped, tag = 'output window, operand 0']
    #allocation3 [shape = 's32[2]{0}', space=sflag, size = 0x8, scoped, tag = 'scoped memory for tpu_custom_call.1']
    %8 = vsyncpa [#allocation3], 0
    %s9 = scalar_lea.sflag [#allocation3], 1
    %10 = vsyncpa %s9, 0
    loop: start=0, step=1, limit=4
    $region2: #{tpu_custom_call.1} parent=1 // loop_pre_header
      _
    $region3: #{tpu_custom_call.1} parent=1 // loop_header
      %s12 = sphi 0, %s16
      %p13 = scmp.ge.s32.totalorder %s12, 4
      %s19 = sphi 0, %s31
      %s20 = sphi 0, %s27
      %s21 = sphi 0, %s19
      %s22 = sphi 0, %s20
      %s23 = sphi 0, %s21
      %s24 = sphi 0, %s22
      %s34 = sphi 0, %s36
      %s37 = sphi 0, %s34
      %s38 = sphi 0, %s37
      %s54 = sphi 0, %s38
      %s58 = sphi 0, %s58
      %s60 = sphi 0, %s58
      %s61 = sphi 0, %s60
      %s75 = sphi 0, %s61
      %s79 = sphi 0, %s79
      %s81 = sphi 0, %s79
      %s82 = sphi 0, %s81
      %s96 = sphi 0, %s82
      %s104 = sphi 0, %s106
      %s107 = sphi 0, %s104
      %s108 = sphi 0, %s107
      %s124 = sphi 0, %s108
    $region4: #{tpu_custom_call.1} parent=1 // loop_header_branch
      %15 = sbr.rel (%p13) target = $region8
    $region5: #{tpu_custom_call.1} parent=1 // loop_body
      %s17 = ssub.s32 %s12, 1
      %s18 = ssub.s32 %s12, 2
      %s25 = sadd.s32 1, %s20
      %p26 = scmp.ge.s32.totalorder %s25, 1
      %s27 = scalar_select %p26, 0, %s25
      %s28 = sadd.s32 1, %s19
      %s29 = scalar_select %p26, %s28, %s19
      %p30 = scmp.ge.s32.totalorder %s29, 2
      %s31 = scalar_select %p30, 0, %s29
      %s32 = ssub.s32 %s19, %s31
      %p33 = scmp.eq.s32.totalorder %s32, 0
      %s35 = sadd.s32 %s34, 1
      %s36 = scalar_select %p33, %s34, %s35
      %p39 = pneg %p33
      %p40 = scmp.eq.s32.totalorder %s12, 1
      %p41 = por %p39, %p40
      %p42 = scmp.ne.s32.totalorder %s34, %s37
      %p43 = scmp.eq.s32.totalorder %s12, 0
      %p44 = por %p42, %p43
      %p45 = scmp.ne.s32.totalorder %s34, %s37
      %p46 = scmp.eq.s32.totalorder %s17, 1
      %p47 = por %p45, %p46
      %p48 = scmp.ne.s32.totalorder %s37, %s38
      %p49 = scmp.eq.s32.totalorder %s17, 0
      %p50 = por %p48, %p49
      %p51 = scmp.ne.s32.totalorder %s37, %s38
      %p52 = scmp.eq.s32.totalorder %s18, 1
      %p53 = por %p51, %p52
      %p55 = scmp.ne.s32.totalorder %s38, %s54
      %p56 = scmp.eq.s32.totalorder %s18, 0
      %p57 = por %p55, %p56
      %s59 = sadd.s32 %s58, 1
      %p62 = scmp.eq.s32.totalorder %s12, 1
      %p63 = scmp.ne.s32.totalorder %s58, %s60
      %p64 = scmp.eq.s32.totalorder %s12, 0
      %p65 = por %p63, %p64
      %p66 = scmp.ne.s32.totalorder %s58, %s60
      %p67 = scmp.eq.s32.totalorder %s17, 1
      %p68 = por %p66, %p67
      %p69 = scmp.ne.s32.totalorder %s60, %s61
      %p70 = scmp.eq.s32.totalorder %s17, 0
      %p71 = por %p69, %p70
      %p72 = scmp.ne.s32.totalorder %s60, %s61
      %p73 = scmp.eq.s32.totalorder %s18, 1
      %p74 = por %p72, %p73
      %p76 = scmp.ne.s32.totalorder %s61, %s75
      %p77 = scmp.eq.s32.totalorder %s18, 0
      %p78 = por %p76, %p77
      %s80 = sadd.s32 %s79, 1
      %p83 = scmp.eq.s32.totalorder %s12, 1
      %p84 = scmp.ne.s32.totalorder %s79, %s81
      %p85 = scmp.eq.s32.totalorder %s12, 0
      %p86 = por %p84, %p85
      %p87 = scmp.ne.s32.totalorder %s79, %s81
      %p88 = scmp.eq.s32.totalorder %s17, 1
      %p89 = por %p87, %p88
      %p90 = scmp.ne.s32.totalorder %s81, %s82
      %p91 = scmp.eq.s32.totalorder %s17, 0
      %p92 = por %p90, %p91
      %p93 = scmp.ne.s32.totalorder %s81, %s82
      %p94 = scmp.eq.s32.totalorder %s18, 1
      %p95 = por %p93, %p94
      %p97 = scmp.ne.s32.totalorder %s82, %s96
      %p98 = scmp.eq.s32.totalorder %s18, 0
      %p99 = por %p97, %p98
      %s100 = ssub.s32 %s19, %s31
      %s101 = ssub.s32 %s20, %s27
      %s102 = sor.u32 %s100, %s101
      %p103 = scmp.eq.s32.totalorder %s102, 0
      %s105 = sadd.s32 %s104, 1
      %s106 = scalar_select %p103, %s104, %s105
      %p109 = pneg %p103
      %p110 = scmp.eq.s32.totalorder %s12, 1
      %p111 = por %p109, %p110
      %p112 = scmp.ne.s32.totalorder %s104, %s107
      %p113 = scmp.eq.s32.totalorder %s12, 0
      %p114 = por %p112, %p113
      %p115 = scmp.ne.s32.totalorder %s104, %s107
      %p116 = scmp.eq.s32.totalorder %s17, 1
      %p117 = por %p115, %p116
      %p118 = scmp.ne.s32.totalorder %s107, %s108
      %p119 = scmp.eq.s32.totalorder %s17, 0
      %p120 = por %p118, %p119
      %p121 = scmp.ne.s32.totalorder %s107, %s108
      %p122 = scmp.eq.s32.totalorder %s18, 1
      %p123 = por %p121, %p122
      %p125 = scmp.ne.s32.totalorder %s108, %s124
      %p126 = scmp.eq.s32.totalorder %s18, 0
      %p127 = por %p125, %p126
      %p128 = scmp.le.s32.totalorder 1, %s12
      %p129 = scmp.lt.s32.totalorder %s12, 3
      %p130 = pnand %p128, %p129
      %p131 = pneg %p130
      // Predicated region
      $region9: #{tpu_custom_call.1} parent=5 // pred_check
        _
      $region10: #{tpu_custom_call.1} parent=5 // pred_check_branch
        %133 = sbr.rel (%p130) target = $region12
      $region11: #{tpu_custom_call.1} parent=5 // pred_region
        %s134 = ssub.s32 %s12, 1
        // Predicated region
        $region13: #{tpu_custom_call.1} parent=11 // pred_check
          %p135 = pneg %p71
        $region14: #{tpu_custom_call.1} parent=11 // pred_check_branch
          %137 = sbr.rel (%p135) target = $region16
        $region15: #{tpu_custom_call.1} parent=11 // pred_region
          _
        $region16: #{tpu_custom_call.1} parent=11 // pred_fallthru
          _
        // Predicated region
        $region17: #{tpu_custom_call.1} parent=11 // pred_check
          %p138 = pneg %p92
        $region18: #{tpu_custom_call.1} parent=11 // pred_check_branch
          %140 = sbr.rel (%p138) target = $region20
        $region19: #{tpu_custom_call.1} parent=11 // pred_region
          _
        $region20: #{tpu_custom_call.1} parent=11 // pred_fallthru
          _
      $region12: #{tpu_custom_call.1} parent=5 // pred_fallthru
        _
      %p141 = scmp.lt.s32.totalorder %s12, 2
      // Predicated region
      $region21: #{tpu_custom_call.1} parent=5 // pred_check
        %p142 = pneg %p141
      $region22: #{tpu_custom_call.1} parent=5 // pred_check_branch
        %144 = sbr.rel (%p142) target = $region24
      $region23: #{tpu_custom_call.1} parent=5 // pred_region
        // Predicated region
        $region25: #{tpu_custom_call.1} parent=23 // pred_check
          %p145 = pneg %p44
        $region26: #{tpu_custom_call.1} parent=23 // pred_check_branch
          %147 = sbr.rel (%p145) target = $region28
        $region27: #{tpu_custom_call.1} parent=23 // pred_region
          %p148 = scmp.lt.s32.totalorder %s19, 1
          %s149 = scalar_select %p148, %s19, 1
          %s150 = smul.addr %s149, 54
          %s151 = smul.addr %s150, 4
          %s152 = scalar_lea.vmem %s0, %s151
        $region28: #{tpu_custom_call.1} parent=23 // pred_fallthru
          _
      $region24: #{tpu_custom_call.1} parent=5 // pred_fallthru
        _
      %p153 = scmp.le.s32.totalorder 1, %s12
      %p154 = scmp.lt.s32.totalorder %s12, 3
      %p155 = pnand %p153, %p154
      %p156 = pneg %p155
      // Predicated region
      $region29: #{tpu_custom_call.1} parent=5 // pred_check
        _
      $region30: #{tpu_custom_call.1} parent=5 // pred_check_branch
        %158 = sbr.rel (%p155) target = $region32
      $region31: #{tpu_custom_call.1} parent=5 // pred_region
        %s159 = ssub.s32 %s12, 1
        %p160 = scmp.lt.s32.totalorder %s21, 1
        %s161 = scalar_select %p160, %s21, 1
        %s162 = smul.addr %s161, 54
        %s163 = smul.addr %s162, 4
        %s164 = scalar_lea.vmem %s0, %s163
        %p165 = pneg %p50
        %p166 = pneg %p47
        %p167 = pneg %p71
        %p168 = pneg %p68
        %p169 = pneg %p92
        %p170 = pneg %p89
        %p171 = pneg %p120
        %p172 = pneg %p117
        %s173 = sand.u32 %s107, 1
        %s174 = scalar_lea.sflag [#allocation3], %s173
        %s175 = sand.u32 %s107, 1
        %s176 = smul.addr %s175, 64
        %s177 = scalar_lea.vmem [#allocation2], %s176
        %p178 = scmp.lt.s32.totalorder %s21, 1
        %s179 = scalar_select %p178, %s21, 1
        %s180 = smul.addr %s179, 54
        %s181 = smul.addr %s180, 4
        %s182 = scalar_lea.vmem %s0, %s181
        %s183 = smul.u32 2, %s22
        %s185 = smul.u32 %s22, 16
        %s186 = smul.u32 %s185, 3
        %s187 = smul.addr %s186, 4
        %s188 = scalar_lea.vmem %s182, %s187
        %v189 = vld [vmem:[%s188] sm:$0xf]
        %v190 = vld [vmem:[%s188 + $0x4] sm:$0xf]
        %v191 = vld [vmem:[%s188 + $0xc] sm:$0xf]
        %v192 = vld [vmem:[%s188 + $0x10] sm:$0xf]
        %v193 = vld [vmem:[%s188 + $0x18] sm:$0xf]
        %v194 = vld [vmem:[%s188 + $0x1c] sm:$0xf]
        %v195 = vld [vmem:[%s188 + $0x24] sm:$0xf]
        %v196 = vld [vmem:[%s188 + $0x28] sm:$0xf]
        %v197 = vld [vmem:[%s188 + $0x30] sm:$0xf]
        %v198 = vld [vmem:[%s188 + $0x34] sm:$0xf]
        %v199 = vld [vmem:[%s188 + $0x3c] sm:$0xf]
        %v200 = vld [vmem:[%s188 + $0x40] sm:$0xf]
        %v201 = vld [vmem:[%s188 + $0x48] sm:$0xf]
        %v202 = vld [vmem:[%s188 + $0x4c] sm:$0xf]
        %v203 = vld [vmem:[%s188 + $0x54] sm:$0xf]
        %v204 = vld [vmem:[%s188 + $0x58] sm:$0xf]
        %v205 = vld [vmem:[%s188 + $0x60] sm:$0xf]
        %v206 = vld [vmem:[%s188 + $0x64] sm:$0xf]
        %v207 = vld [vmem:[%s188 + $0x6c] sm:$0xf]
        %v208 = vld [vmem:[%s188 + $0x70] sm:$0xf]
        %v209 = vld [vmem:[%s188 + $0x78] sm:$0xf]
        %v210 = vld [vmem:[%s188 + $0x7c] sm:$0xf]
        %v211 = vld [vmem:[%s188 + $0x84] sm:$0xf]
        %v212 = vld [vmem:[%s188 + $0x88] sm:$0xf]
        %v213 = vld [vmem:[%s188 + $0x90] sm:$0xf]
        %v214 = vld [vmem:[%s188 + $0x94] sm:$0xf]
        %v215 = vld [vmem:[%s188 + $0x9c] sm:$0xf]
        %v216 = vld [vmem:[%s188 + $0xa0] sm:$0xf]
        %v217 = vld [vmem:[%s188 + $0xa8] sm:$0xf]
        %v218 = vld [vmem:[%s188 + $0xac] sm:$0xf]
        %v219 = vld [vmem:[%s188 + $0xb4] sm:$0xf]
        %v220 = vld [vmem:[%s188 + $0xb8] sm:$0xf]
        %v221 = vld [vmem:[%s188 + $0x8] sm:$0x1]
        %v222 = vld [vmem:[%s188 + $0x14] sm:$0x1]
        %v223 = vld [vmem:[%s188 + $0x20] sm:$0x1]
        %v224 = vld [vmem:[%s188 + $0x2c] sm:$0x1]
        %v225 = vld [vmem:[%s188 + $0x38] sm:$0x1]
        %v226 = vld [vmem:[%s188 + $0x44] sm:$0x1]
        %v227 = vld [vmem:[%s188 + $0x50] sm:$0x1]
        %v228 = vld [vmem:[%s188 + $0x5c] sm:$0x1]
        %v229 = vld [vmem:[%s188 + $0x68] sm:$0x1]
        %v230 = vld [vmem:[%s188 + $0x74] sm:$0x1]
        %v231 = vld [vmem:[%s188 + $0x80] sm:$0x1]
        %v232 = vld [vmem:[%s188 + $0x8c] sm:$0x1]
        %v233 = vld [vmem:[%s188 + $0x98] sm:$0x1]
        %v234 = vld [vmem:[%s188 + $0xa4] sm:$0x1]
        %v235 = vld [vmem:[%s188 + $0xb0] sm:$0x1]
        %v236 = vld [vmem:[%s188 + $0xbc] sm:$0x1]
        %vm237 = vsmask.f32 3328
        %vm238 = vsmask.f32 7440
        %vm239 = vmor %vm237, %vm238
        %v241 = vshrl.u32 %v189, 16
        %v243 = vrot.slane %v241, 4
        %v244 = vshll.u32 %v189, 16
        %v246 = vrot.slane %v244, 5
        %v247 = vor.u32 %v243, %v246
        %v248 = vrot.slane %v247, 4
        %v250 = vshll.u32 %v190, 16
        %v252 = vrot.slane %v250, 5
        %v253 = vsel %vm239, %v248, %v252
        %v254 = vshrl.u32 %v190, 16
        %v256 = vrot.slane %v254, 4
        %v257 = vor.u32 %v256, %v252
        %v258 = vrot.slane %v257, 4
        %v260 = vshll.u32 %v221, 16
        %v262 = vrot.slane %v260, 5
        %v263 = vsel %vm239, %v258, %v262
        %v265 = vshrl.u32 %v191, 16
        %v267 = vrot.slane %v265, 4
        %v268 = vshll.u32 %v191, 16
        %v270 = vrot.slane %v268, 5
        %v271 = vor.u32 %v267, %v270
        %v272 = vrot.slane %v271, 4
        %v274 = vshll.u32 %v192, 16
        %v276 = vrot.slane %v274, 5
        %v277 = vsel %vm239, %v272, %v276
        %v278 = vshrl.u32 %v192, 16
        %v280 = vrot.slane %v278, 4
        %v281 = vor.u32 %v280, %v276
        %v282 = vrot.slane %v281, 4
        %v284 = vshll.u32 %v222, 16
        %v286 = vrot.slane %v284, 5
        %v287 = vsel %vm239, %v282, %v286
        %v289 = vshrl.u32 %v193, 16
        %v291 = vrot.slane %v289, 4
        %v292 = vshll.u32 %v193, 16
        %v294 = vrot.slane %v292, 5
        %v295 = vor.u32 %v291, %v294
        %v296 = vrot.slane %v295, 4
        %v298 = vshll.u32 %v194, 16
        %v300 = vrot.slane %v298, 5
        %v301 = vsel %vm239, %v296, %v300
        %v302 = vshrl.u32 %v194, 16
        %v304 = vrot.slane %v302, 4
        %v305 = vor.u32 %v304, %v300
        %v306 = vrot.slane %v305, 4
        %v308 = vshll.u32 %v223, 16
        %v310 = vrot.slane %v308, 5
        %v311 = vsel %vm239, %v306, %v310
        %v313 = vshrl.u32 %v195, 16
        %v315 = vrot.slane %v313, 4
        %v316 = vshll.u32 %v195, 16
        %v318 = vrot.slane %v316, 5
        %v319 = vor.u32 %v315, %v318
        %v320 = vrot.slane %v319, 4
        %v322 = vshll.u32 %v196, 16
        %v324 = vrot.slane %v322, 5
        %v325 = vsel %vm239, %v320, %v324
        %v326 = vshrl.u32 %v196, 16
        %v328 = vrot.slane %v326, 4
        %v329 = vor.u32 %v328, %v324
        %v330 = vrot.slane %v329, 4
        %v332 = vshll.u32 %v224, 16
        %v334 = vrot.slane %v332, 5
        %v335 = vsel %vm239, %v330, %v334
        %v337 = vshrl.u32 %v197, 16
        %v339 = vrot.slane %v337, 4
        %v340 = vshll.u32 %v197, 16
        %v342 = vrot.slane %v340, 5
        %v343 = vor.u32 %v339, %v342
        %v344 = vrot.slane %v343, 4
        %v346 = vshll.u32 %v198, 16
        %v348 = vrot.slane %v346, 5
        %v349 = vsel %vm239, %v344, %v348
        %v350 = vshrl.u32 %v198, 16
        %v352 = vrot.slane %v350, 4
        %v353 = vor.u32 %v352, %v348
        %v354 = vrot.slane %v353, 4
        %v356 = vshll.u32 %v225, 16
        %v358 = vrot.slane %v356, 5
        %v359 = vsel %vm239, %v354, %v358
        %v361 = vshrl.u32 %v199, 16
        %v363 = vrot.slane %v361, 4
        %v364 = vshll.u32 %v199, 16
        %v366 = vrot.slane %v364, 5
        %v367 = vor.u32 %v363, %v366
        %v368 = vrot.slane %v367, 4
        %v370 = vshll.u32 %v200, 16
        %v372 = vrot.slane %v370, 5
        %v373 = vsel %vm239, %v368, %v372
        %v374 = vshrl.u32 %v200, 16
        %v376 = vrot.slane %v374, 4
        %v377 = vor.u32 %v376, %v372
        %v378 = vrot.slane %v377, 4
        %v380 = vshll.u32 %v226, 16
        %v382 = vrot.slane %v380, 5
        %v383 = vsel %vm239, %v378, %v382
        %v385 = vshrl.u32 %v201, 16
        %v387 = vrot.slane %v385, 4
        %v388 = vshll.u32 %v201, 16
        %v390 = vrot.slane %v388, 5
        %v391 = vor.u32 %v387, %v390
        %v392 = vrot.slane %v391, 4
        %v394 = vshll.u32 %v202, 16
        %v396 = vrot.slane %v394, 5
        %v397 = vsel %vm239, %v392, %v396
        %v398 = vshrl.u32 %v202, 16
        %v400 = vrot.slane %v398, 4
        %v401 = vor.u32 %v400, %v396
        %v402 = vrot.slane %v401, 4
        %v404 = vshll.u32 %v227, 16
        %v406 = vrot.slane %v404, 5
        %v407 = vsel %vm239, %v402, %v406
        %v409 = vshrl.u32 %v203, 16
        %v411 = vrot.slane %v409, 4
        %v412 = vshll.u32 %v203, 16
        %v414 = vrot.slane %v412, 5
        %v415 = vor.u32 %v411, %v414
        %v416 = vrot.slane %v415, 4
        %v418 = vshll.u32 %v204, 16
        %v420 = vrot.slane %v418, 5
        %v421 = vsel %vm239, %v416, %v420
        %v422 = vshrl.u32 %v204, 16
        %v424 = vrot.slane %v422, 4
        %v425 = vor.u32 %v424, %v420
        %v426 = vrot.slane %v425, 4
        %v428 = vshll.u32 %v228, 16
        %v430 = vrot.slane %v428, 5
        %v431 = vsel %vm239, %v426, %v430
        %v433 = vshrl.u32 %v205, 16
        %v435 = vrot.slane %v433, 4
        %v436 = vshll.u32 %v205, 16
        %v438 = vrot.slane %v436, 5
        %v439 = vor.u32 %v435, %v438
        %v440 = vrot.slane %v439, 4
        %v442 = vshll.u32 %v206, 16
        %v444 = vrot.slane %v442, 5
        %v445 = vsel %vm239, %v440, %v444
        %v446 = vshrl.u32 %v206, 16
        %v448 = vrot.slane %v446, 4
        %v449 = vor.u32 %v448, %v444
        %v450 = vrot.slane %v449, 4
        %v452 = vshll.u32 %v229, 16
        %v454 = vrot.slane %v452, 5
        %v455 = vsel %vm239, %v450, %v454
        %v457 = vshrl.u32 %v207, 16
        %v459 = vrot.slane %v457, 4
        %v460 = vshll.u32 %v207, 16
        %v462 = vrot.slane %v460, 5
        %v463 = vor.u32 %v459, %v462
        %v464 = vrot.slane %v463, 4
        %v466 = vshll.u32 %v208, 16
        %v468 = vrot.slane %v466, 5
        %v469 = vsel %vm239, %v464, %v468
        %v470 = vshrl.u32 %v208, 16
        %v472 = vrot.slane %v470, 4
        %v473 = vor.u32 %v472, %v468
        %v474 = vrot.slane %v473, 4
        %v476 = vshll.u32 %v230, 16
        %v478 = vrot.slane %v476, 5
        %v479 = vsel %vm239, %v474, %v478
        %v481 = vshrl.u32 %v209, 16
        %v483 = vrot.slane %v481, 4
        %v484 = vshll.u32 %v209, 16
        %v486 = vrot.slane %v484, 5
        %v487 = vor.u32 %v483, %v486
        %v488 = vrot.slane %v487, 4
        %v490 = vshll.u32 %v210, 16
        %v492 = vrot.slane %v490, 5
        %v493 = vsel %vm239, %v488, %v492
        %v494 = vshrl.u32 %v210, 16
        %v496 = vrot.slane %v494, 4
        %v497 = vor.u32 %v496, %v492
        %v498 = vrot.slane %v497, 4
        %v500 = vshll.u32 %v231, 16
        %v502 = vrot.slane %v500, 5
        %v503 = vsel %vm239, %v498, %v502
        %v505 = vshrl.u32 %v211, 16
        %v507 = vrot.slane %v505, 4
        %v508 = vshll.u32 %v211, 16
        %v510 = vrot.slane %v508, 5
        %v511 = vor.u32 %v507, %v510
        %v512 = vrot.slane %v511, 4
        %v514 = vshll.u32 %v212, 16
        %v516 = vrot.slane %v514, 5
        %v517 = vsel %vm239, %v512, %v516
        %v518 = vshrl.u32 %v212, 16
        %v520 = vrot.slane %v518, 4
        %v521 = vor.u32 %v520, %v516
        %v522 = vrot.slane %v521, 4
        %v524 = vshll.u32 %v232, 16
        %v526 = vrot.slane %v524, 5
        %v527 = vsel %vm239, %v522, %v526
        %v529 = vshrl.u32 %v213, 16
        %v531 = vrot.slane %v529, 4
        %v532 = vshll.u32 %v213, 16
        %v534 = vrot.slane %v532, 5
        %v535 = vor.u32 %v531, %v534
        %v536 = vrot.slane %v535, 4
        %v538 = vshll.u32 %v214, 16
        %v540 = vrot.slane %v538, 5
        %v541 = vsel %vm239, %v536, %v540
        %v542 = vshrl.u32 %v214, 16
        %v544 = vrot.slane %v542, 4
        %v545 = vor.u32 %v544, %v540
        %v546 = vrot.slane %v545, 4
        %v548 = vshll.u32 %v233, 16
        %v550 = vrot.slane %v548, 5
        %v551 = vsel %vm239, %v546, %v550
        %v553 = vshrl.u32 %v215, 16
        %v555 = vrot.slane %v553, 4
        %v556 = vshll.u32 %v215, 16
        %v558 = vrot.slane %v556, 5
        %v559 = vor.u32 %v555, %v558
        %v560 = vrot.slane %v559, 4
        %v562 = vshll.u32 %v216, 16
        %v564 = vrot.slane %v562, 5
        %v565 = vsel %vm239, %v560, %v564
        %v566 = vshrl.u32 %v216, 16
        %v568 = vrot.slane %v566, 4
        %v569 = vor.u32 %v568, %v564
        %v570 = vrot.slane %v569, 4
        %v572 = vshll.u32 %v234, 16
        %v574 = vrot.slane %v572, 5
        %v575 = vsel %vm239, %v570, %v574
        %v577 = vshrl.u32 %v217, 16
        %v579 = vrot.slane %v577, 4
        %v580 = vshll.u32 %v217, 16
        %v582 = vrot.slane %v580, 5
        %v583 = vor.u32 %v579, %v582
        %v584 = vrot.slane %v583, 4
        %v586 = vshll.u32 %v218, 16
        %v588 = vrot.slane %v586, 5
        %v589 = vsel %vm239, %v584, %v588
        %v590 = vshrl.u32 %v218, 16
        %v592 = vrot.slane %v590, 4
        %v593 = vor.u32 %v592, %v588
        %v594 = vrot.slane %v593, 4
        %v596 = vshll.u32 %v235, 16
        %v598 = vrot.slane %v596, 5
        %v599 = vsel %vm239, %v594, %v598
        %v601 = vshrl.u32 %v219, 16
        %v603 = vrot.slane %v601, 4
        %v604 = vshll.u32 %v219, 16
        %v606 = vrot.slane %v604, 5
        %v607 = vor.u32 %v603, %v606
        %v608 = vrot.slane %v607, 4
        %v610 = vshll.u32 %v220, 16
        %v612 = vrot.slane %v610, 5
        %v613 = vsel %vm239, %v608, %v612
        %v614 = vshrl.u32 %v220, 16
        %v616 = vrot.slane %v614, 4
        %v617 = vor.u32 %v616, %v612
        %v618 = vrot.slane %v617, 4
        %v620 = vshll.u32 %v236, 16
        %v622 = vrot.slane %v620, 5
        %v623 = vsel %vm239, %v618, %v622
        %v624 = vld [vmem:[%s188] sm:$0xe]
        %v625 = vld [vmem:[%s188 + $0xc] sm:$0xe]
        %v626 = vld [vmem:[%s188 + $0x18] sm:$0xe]
        %v627 = vld [vmem:[%s188 + $0x24] sm:$0xe]
        %v628 = vld [vmem:[%s188 + $0x30] sm:$0xe]
        %v629 = vld [vmem:[%s188 + $0x3c] sm:$0xe]
        %v630 = vld [vmem:[%s188 + $0x48] sm:$0xe]
        %v631 = vld [vmem:[%s188 + $0x54] sm:$0xe]
        %v632 = vld [vmem:[%s188 + $0x60] sm:$0xe]
        %v633 = vld [vmem:[%s188 + $0x6c] sm:$0xe]
        %v634 = vld [vmem:[%s188 + $0x78] sm:$0xe]
        %v635 = vld [vmem:[%s188 + $0x84] sm:$0xe]
        %v636 = vld [vmem:[%s188 + $0x90] sm:$0xe]
        %v637 = vld [vmem:[%s188 + $0x9c] sm:$0xe]
        %v638 = vld [vmem:[%s188 + $0xa8] sm:$0xe]
        %v639 = vld [vmem:[%s188 + $0xb4] sm:$0xe]
        %vm688 = vcmask 1042432
        %vm689 = vcmask 1046532
        %vm690 = vmor %vm688, %vm689
        %v691 = vrot.slane %v624, 5
        %v692 = vrot.slane %v691, 4
        %v693 = vrot.slane %v190, 5
        %v694 = vsel %vm690, %v692, %v693
        %v695 = vrot.slane %v693, 4
        %v696 = vrot.slane %v221, 5
        %v697 = vsel %vm690, %v695, %v696
        %v698 = vrot.slane %v625, 5
        %v699 = vrot.slane %v698, 4
        %v700 = vrot.slane %v192, 5
        %v701 = vsel %vm690, %v699, %v700
        %v702 = vrot.slane %v700, 4
        %v703 = vrot.slane %v222, 5
        %v704 = vsel %vm690, %v702, %v703
        %v705 = vrot.slane %v626, 5
        %v706 = vrot.slane %v705, 4
        %v707 = vrot.slane %v194, 5
        %v708 = vsel %vm690, %v706, %v707
        %v709 = vrot.slane %v707, 4
        %v710 = vrot.slane %v223, 5
        %v711 = vsel %vm690, %v709, %v710
        %v712 = vrot.slane %v627, 5
        %v713 = vrot.slane %v712, 4
        %v714 = vrot.slane %v196, 5
        %v715 = vsel %vm690, %v713, %v714
        %v716 = vrot.slane %v714, 4
        %v717 = vrot.slane %v224, 5
        %v718 = vsel %vm690, %v716, %v717
        %v719 = vrot.slane %v628, 5
        %v720 = vrot.slane %v719, 4
        %v721 = vrot.slane %v198, 5
        %v722 = vsel %vm690, %v720, %v721
        %v723 = vrot.slane %v721, 4
        %v724 = vrot.slane %v225, 5
        %v725 = vsel %vm690, %v723, %v724
        %v726 = vrot.slane %v629, 5
        %v727 = vrot.slane %v726, 4
        %v728 = vrot.slane %v200, 5
        %v729 = vsel %vm690, %v727, %v728
        %v730 = vrot.slane %v728, 4
        %v731 = vrot.slane %v226, 5
        %v732 = vsel %vm690, %v730, %v731
        %v733 = vrot.slane %v630, 5
        %v734 = vrot.slane %v733, 4
        %v735 = vrot.slane %v202, 5
        %v736 = vsel %vm690, %v734, %v735
        %v737 = vrot.slane %v735, 4
        %v738 = vrot.slane %v227, 5
        %v739 = vsel %vm690, %v737, %v738
        %v740 = vrot.slane %v631, 5
        %v741 = vrot.slane %v740, 4
        %v742 = vrot.slane %v204, 5
        %v743 = vsel %vm690, %v741, %v742
        %v744 = vrot.slane %v742, 4
        %v745 = vrot.slane %v228, 5
        %v746 = vsel %vm690, %v744, %v745
        %v747 = vrot.slane %v632, 5
        %v748 = vrot.slane %v747, 4
        %v749 = vrot.slane %v206, 5
        %v750 = vsel %vm690, %v748, %v749
        %v751 = vrot.slane %v749, 4
        %v752 = vrot.slane %v229, 5
        %v753 = vsel %vm690, %v751, %v752
        %v754 = vrot.slane %v633, 5
        %v755 = vrot.slane %v754, 4
        %v756 = vrot.slane %v208, 5
        %v757 = vsel %vm690, %v755, %v756
        %v758 = vrot.slane %v756, 4
        %v759 = vrot.slane %v230, 5
        %v760 = vsel %vm690, %v758, %v759
        %v761 = vrot.slane %v634, 5
        %v762 = vrot.slane %v761, 4
        %v763 = vrot.slane %v210, 5
        %v764 = vsel %vm690, %v762, %v763
        %v765 = vrot.slane %v763, 4
        %v766 = vrot.slane %v231, 5
        %v767 = vsel %vm690, %v765, %v766
        %v768 = vrot.slane %v635, 5
        %v769 = vrot.slane %v768, 4
        %v770 = vrot.slane %v212, 5
        %v771 = vsel %vm690, %v769, %v770
        %v772 = vrot.slane %v770, 4
        %v773 = vrot.slane %v232, 5
        %v774 = vsel %vm690, %v772, %v773
        %v775 = vrot.slane %v636, 5
        %v776 = vrot.slane %v775, 4
        %v777 = vrot.slane %v214, 5
        %v778 = vsel %vm690, %v776, %v777
        %v779 = vrot.slane %v777, 4
        %v780 = vrot.slane %v233, 5
        %v781 = vsel %vm690, %v779, %v780
        %v782 = vrot.slane %v637, 5
        %v783 = vrot.slane %v782, 4
        %v784 = vrot.slane %v216, 5
        %v785 = vsel %vm690, %v783, %v784
        %v786 = vrot.slane %v784, 4
        %v787 = vrot.slane %v234, 5
        %v788 = vsel %vm690, %v786, %v787
        %v789 = vrot.slane %v638, 5
        %v790 = vrot.slane %v789, 4
        %v791 = vrot.slane %v218, 5
        %v792 = vsel %vm690, %v790, %v791
        %v793 = vrot.slane %v791, 4
        %v794 = vrot.slane %v235, 5
        %v795 = vsel %vm690, %v793, %v794
        %v796 = vrot.slane %v639, 5
        %v797 = vrot.slane %v796, 4
        %v798 = vrot.slane %v220, 5
        %v799 = vsel %vm690, %v797, %v798
        %v800 = vrot.slane %v798, 4
        %v801 = vrot.slane %v236, 5
        %v802 = vsel %vm690, %v800, %v801
        %s803 = sadd.s32 %s185, 1
        %s804 = smul.u32 %s803, 3
        %s805 = smul.addr %s804, 4
        %s806 = scalar_lea.vmem %s182, %s805
        %v807 = vld [vmem:[%s806] sm:$0xf]
        %v808 = vld [vmem:[%s806 + $0x4] sm:$0xf]
        %v809 = vld [vmem:[%s806 + $0xc] sm:$0xf]
        %v810 = vld [vmem:[%s806 + $0x10] sm:$0xf]
        %v811 = vld [vmem:[%s806 + $0x18] sm:$0xf]
        %v812 = vld [vmem:[%s806 + $0x1c] sm:$0xf]
        %v813 = vld [vmem:[%s806 + $0x24] sm:$0xf]
        %v814 = vld [vmem:[%s806 + $0x28] sm:$0xf]
        %v815 = vld [vmem:[%s806 + $0x30] sm:$0xf]
        %v816 = vld [vmem:[%s806 + $0x34] sm:$0xf]
        %v817 = vld [vmem:[%s806 + $0x3c] sm:$0xf]
        %v818 = vld [vmem:[%s806 + $0x40] sm:$0xf]
        %v819 = vld [vmem:[%s806 + $0x48] sm:$0xf]
        %v820 = vld [vmem:[%s806 + $0x4c] sm:$0xf]
        %v821 = vld [vmem:[%s806 + $0x54] sm:$0xf]
        %v822 = vld [vmem:[%s806 + $0x58] sm:$0xf]
        %v823 = vld [vmem:[%s806 + $0x60] sm:$0xf]
        %v824 = vld [vmem:[%s806 + $0x64] sm:$0xf]
        %v825 = vld [vmem:[%s806 + $0x6c] sm:$0xf]
        %v826 = vld [vmem:[%s806 + $0x70] sm:$0xf]
        %v827 = vld [vmem:[%s806 + $0x78] sm:$0xf]
        %v828 = vld [vmem:[%s806 + $0x7c] sm:$0xf]
        %v829 = vld [vmem:[%s806 + $0x84] sm:$0xf]
        %v830 = vld [vmem:[%s806 + $0x88] sm:$0xf]
        %v831 = vld [vmem:[%s806 + $0x90] sm:$0xf]
        %v832 = vld [vmem:[%s806 + $0x94] sm:$0xf]
        %v833 = vld [vmem:[%s806 + $0x9c] sm:$0xf]
        %v834 = vld [vmem:[%s806 + $0xa0] sm:$0xf]
        %v835 = vld [vmem:[%s806 + $0xa8] sm:$0xf]
        %v836 = vld [vmem:[%s806 + $0xac] sm:$0xf]
        %v837 = vld [vmem:[%s806 + $0xb4] sm:$0xf]
        %v838 = vld [vmem:[%s806 + $0xb8] sm:$0xf]
        %v839 = vld [vmem:[%s806 + $0x8] sm:$0x1]
        %v840 = vld [vmem:[%s806 + $0x14] sm:$0x1]
        %v841 = vld [vmem:[%s806 + $0x20] sm:$0x1]
        %v842 = vld [vmem:[%s806 + $0x2c] sm:$0x1]
        %v843 = vld [vmem:[%s806 + $0x38] sm:$0x1]
        %v844 = vld [vmem:[%s806 + $0x44] sm:$0x1]
        %v845 = vld [vmem:[%s806 + $0x50] sm:$0x1]
        %v846 = vld [vmem:[%s806 + $0x5c] sm:$0x1]
        %v847 = vld [vmem:[%s806 + $0x68] sm:$0x1]
        %v848 = vld [vmem:[%s806 + $0x74] sm:$0x1]
        %v849 = vld [vmem:[%s806 + $0x80] sm:$0x1]
        %v850 = vld [vmem:[%s806 + $0x8c] sm:$0x1]
        %v851 = vld [vmem:[%s806 + $0x98] sm:$0x1]
        %v852 = vld [vmem:[%s806 + $0xa4] sm:$0x1]
        %v853 = vld [vmem:[%s806 + $0xb0] sm:$0x1]
        %v854 = vld [vmem:[%s806 + $0xbc] sm:$0x1]
        %v856 = vshrl.u32 %v807, 16
        %v858 = vrot.slane %v856, 4
        %v859 = vshll.u32 %v807, 16
        %v861 = vrot.slane %v859, 5
        %v862 = vor.u32 %v858, %v861
        %v863 = vrot.slane %v862, 4
        %v865 = vshll.u32 %v808, 16
        %v867 = vrot.slane %v865, 5
        %v868 = vsel %vm239, %v863, %v867
        %v869 = vshrl.u32 %v808, 16
        %v871 = vrot.slane %v869, 4
        %v872 = vor.u32 %v871, %v867
        %v873 = vrot.slane %v872, 4
        %v875 = vshll.u32 %v839, 16
        %v877 = vrot.slane %v875, 5
        %v878 = vsel %vm239, %v873, %v877
        %v880 = vshrl.u32 %v809, 16
        %v882 = vrot.slane %v880, 4
        %v883 = vshll.u32 %v809, 16
        %v885 = vrot.slane %v883, 5
        %v886 = vor.u32 %v882, %v885
        %v887 = vrot.slane %v886, 4
        %v889 = vshll.u32 %v810, 16
        %v891 = vrot.slane %v889, 5
        %v892 = vsel %vm239, %v887, %v891
        %v893 = vshrl.u32 %v810, 16
        %v895 = vrot.slane %v893, 4
        %v896 = vor.u32 %v895, %v891
        %v897 = vrot.slane %v896, 4
        %v899 = vshll.u32 %v840, 16
        %v901 = vrot.slane %v899, 5
        %v902 = vsel %vm239, %v897, %v901
        %v904 = vshrl.u32 %v811, 16
        %v906 = vrot.slane %v904, 4
        %v907 = vshll.u32 %v811, 16
        %v909 = vrot.slane %v907, 5
        %v910 = vor.u32 %v906, %v909
        %v911 = vrot.slane %v910, 4
        %v913 = vshll.u32 %v812, 16
        %v915 = vrot.slane %v913, 5
        %v916 = vsel %vm239, %v911, %v915
        %v917 = vshrl.u32 %v812, 16
        %v919 = vrot.slane %v917, 4
        %v920 = vor.u32 %v919, %v915
        %v921 = vrot.slane %v920, 4
        %v923 = vshll.u32 %v841, 16
        %v925 = vrot.slane %v923, 5
        %v926 = vsel %vm239, %v921, %v925
        %v928 = vshrl.u32 %v813, 16
        %v930 = vrot.slane %v928, 4
        %v931 = vshll.u32 %v813, 16
        %v933 = vrot.slane %v931, 5
        %v934 = vor.u32 %v930, %v933
        %v935 = vrot.slane %v934, 4
        %v937 = vshll.u32 %v814, 16
        %v939 = vrot.slane %v937, 5
        %v940 = vsel %vm239, %v935, %v939
        %v941 = vshrl.u32 %v814, 16
        %v943 = vrot.slane %v941, 4
        %v944 = vor.u32 %v943, %v939
        %v945 = vrot.slane %v944, 4
        %v947 = vshll.u32 %v842, 16
        %v949 = vrot.slane %v947, 5
        %v950 = vsel %vm239, %v945, %v949
        %v952 = vshrl.u32 %v815, 16
        %v954 = vrot.slane %v952, 4
        %v955 = vshll.u32 %v815, 16
        %v957 = vrot.slane %v955, 5
        %v958 = vor.u32 %v954, %v957
        %v959 = vrot.slane %v958, 4
        %v961 = vshll.u32 %v816, 16
        %v963 = vrot.slane %v961, 5
        %v964 = vsel %vm239, %v959, %v963
        %v965 = vshrl.u32 %v816, 16
        %v967 = vrot.slane %v965, 4
        %v968 = vor.u32 %v967, %v963
        %v969 = vrot.slane %v968, 4
        %v971 = vshll.u32 %v843, 16
        %v973 = vrot.slane %v971, 5
        %v974 = vsel %vm239, %v969, %v973
        %v976 = vshrl.u32 %v817, 16
        %v978 = vrot.slane %v976, 4
        %v979 = vshll.u32 %v817, 16
        %v981 = vrot.slane %v979, 5
        %v982 = vor.u32 %v978, %v981
        %v983 = vrot.slane %v982, 4
        %v985 = vshll.u32 %v818, 16
        %v987 = vrot.slane %v985, 5
        %v988 = vsel %vm239, %v983, %v987
        %v989 = vshrl.u32 %v818, 16
        %v991 = vrot.slane %v989, 4
        %v992 = vor.u32 %v991, %v987
        %v993 = vrot.slane %v992, 4
        %v995 = vshll.u32 %v844, 16
        %v997 = vrot.slane %v995, 5
        %v998 = vsel %vm239, %v993, %v997
        %v1000 = vshrl.u32 %v819, 16
        %v1002 = vrot.slane %v1000, 4
        %v1003 = vshll.u32 %v819, 16
        %v1005 = vrot.slane %v1003, 5
        %v1006 = vor.u32 %v1002, %v1005
        %v1007 = vrot.slane %v1006, 4
        %v1009 = vshll.u32 %v820, 16
        %v1011 = vrot.slane %v1009, 5
        %v1012 = vsel %vm239, %v1007, %v1011
        %v1013 = vshrl.u32 %v820, 16
        %v1015 = vrot.slane %v1013, 4
        %v1016 = vor.u32 %v1015, %v1011
        %v1017 = vrot.slane %v1016, 4
        %v1019 = vshll.u32 %v845, 16
        %v1021 = vrot.slane %v1019, 5
        %v1022 = vsel %vm239, %v1017, %v1021
        %v1024 = vshrl.u32 %v821, 16
        %v1026 = vrot.slane %v1024, 4
        %v1027 = vshll.u32 %v821, 16
        %v1029 = vrot.slane %v1027, 5
        %v1030 = vor.u32 %v1026, %v1029
        %v1031 = vrot.slane %v1030, 4
        %v1033 = vshll.u32 %v822, 16
        %v1035 = vrot.slane %v1033, 5
        %v1036 = vsel %vm239, %v1031, %v1035
        %v1037 = vshrl.u32 %v822, 16
        %v1039 = vrot.slane %v1037, 4
        %v1040 = vor.u32 %v1039, %v1035
        %v1041 = vrot.slane %v1040, 4
        %v1043 = vshll.u32 %v846, 16
        %v1045 = vrot.slane %v1043, 5
        %v1046 = vsel %vm239, %v1041, %v1045
        %v1048 = vshrl.u32 %v823, 16
        %v1050 = vrot.slane %v1048, 4
        %v1051 = vshll.u32 %v823, 16
        %v1053 = vrot.slane %v1051, 5
        %v1054 = vor.u32 %v1050, %v1053
        %v1055 = vrot.slane %v1054, 4
        %v1057 = vshll.u32 %v824, 16
        %v1059 = vrot.slane %v1057, 5
        %v1060 = vsel %vm239, %v1055, %v1059
        %v1061 = vshrl.u32 %v824, 16
        %v1063 = vrot.slane %v1061, 4
        %v1064 = vor.u32 %v1063, %v1059
        %v1065 = vrot.slane %v1064, 4
        %v1067 = vshll.u32 %v847, 16
        %v1069 = vrot.slane %v1067, 5
        %v1070 = vsel %vm239, %v1065, %v1069
        %v1072 = vshrl.u32 %v825, 16
        %v1074 = vrot.slane %v1072, 4
        %v1075 = vshll.u32 %v825, 16
        %v1077 = vrot.slane %v1075, 5
        %v1078 = vor.u32 %v1074, %v1077
        %v1079 = vrot.slane %v1078, 4
        %v1081 = vshll.u32 %v826, 16
        %v1083 = vrot.slane %v1081, 5
        %v1084 = vsel %vm239, %v1079, %v1083
        %v1085 = vshrl.u32 %v826, 16
        %v1087 = vrot.slane %v1085, 4
        %v1088 = vor.u32 %v1087, %v1083
        %v1089 = vrot.slane %v1088, 4
        %v1091 = vshll.u32 %v848, 16
        %v1093 = vrot.slane %v1091, 5
        %v1094 = vsel %vm239, %v1089, %v1093
        %v1096 = vshrl.u32 %v827, 16
        %v1098 = vrot.slane %v1096, 4
        %v1099 = vshll.u32 %v827, 16
        %v1101 = vrot.slane %v1099, 5
        %v1102 = vor.u32 %v1098, %v1101
        %v1103 = vrot.slane %v1102, 4
        %v1105 = vshll.u32 %v828, 16
        %v1107 = vrot.slane %v1105, 5
        %v1108 = vsel %vm239, %v1103, %v1107
        %v1109 = vshrl.u32 %v828, 16
        %v1111 = vrot.slane %v1109, 4
        %v1112 = vor.u32 %v1111, %v1107
        %v1113 = vrot.slane %v1112, 4
        %v1115 = vshll.u32 %v849, 16
        %v1117 = vrot.slane %v1115, 5
        %v1118 = vsel %vm239, %v1113, %v1117
        %v1120 = vshrl.u32 %v829, 16
        %v1122 = vrot.slane %v1120, 4
        %v1123 = vshll.u32 %v829, 16
        %v1125 = vrot.slane %v1123, 5
        %v1126 = vor.u32 %v1122, %v1125
        %v1127 = vrot.slane %v1126, 4
        %v1129 = vshll.u32 %v830, 16
        %v1131 = vrot.slane %v1129, 5
        %v1132 = vsel %vm239, %v1127, %v1131
        %v1133 = vshrl.u32 %v830, 16
        %v1135 = vrot.slane %v1133, 4
        %v1136 = vor.u32 %v1135, %v1131
        %v1137 = vrot.slane %v1136, 4
        %v1139 = vshll.u32 %v850, 16
        %v1141 = vrot.slane %v1139, 5
        %v1142 = vsel %vm239, %v1137, %v1141
        %v1144 = vshrl.u32 %v831, 16
        %v1146 = vrot.slane %v1144, 4
        %v1147 = vshll.u32 %v831, 16
        %v1149 = vrot.slane %v1147, 5
        %v1150 = vor.u32 %v1146, %v1149
        %v1151 = vrot.slane %v1150, 4
        %v1153 = vshll.u32 %v832, 16
        %v1155 = vrot.slane %v1153, 5
        %v1156 = vsel %vm239, %v1151, %v1155
        %v1157 = vshrl.u32 %v832, 16
        %v1159 = vrot.slane %v1157, 4
        %v1160 = vor.u32 %v1159, %v1155
        %v1161 = vrot.slane %v1160, 4
        %v1163 = vshll.u32 %v851, 16
        %v1165 = vrot.slane %v1163, 5
        %v1166 = vsel %vm239, %v1161, %v1165
        %v1168 = vshrl.u32 %v833, 16
        %v1170 = vrot.slane %v1168, 4
        %v1171 = vshll.u32 %v833, 16
        %v1173 = vrot.slane %v1171, 5
        %v1174 = vor.u32 %v1170, %v1173
        %v1175 = vrot.slane %v1174, 4
        %v1177 = vshll.u32 %v834, 16
        %v1179 = vrot.slane %v1177, 5
        %v1180 = vsel %vm239, %v1175, %v1179
        %v1181 = vshrl.u32 %v834, 16
        %v1183 = vrot.slane %v1181, 4
        %v1184 = vor.u32 %v1183, %v1179
        %v1185 = vrot.slane %v1184, 4
        %v1187 = vshll.u32 %v852, 16
        %v1189 = vrot.slane %v1187, 5
        %v1190 = vsel %vm239, %v1185, %v1189
        %v1192 = vshrl.u32 %v835, 16
        %v1194 = vrot.slane %v1192, 4
        %v1195 = vshll.u32 %v835, 16
        %v1197 = vrot.slane %v1195, 5
        %v1198 = vor.u32 %v1194, %v1197
        %v1199 = vrot.slane %v1198, 4
        %v1201 = vshll.u32 %v836, 16
        %v1203 = vrot.slane %v1201, 5
        %v1204 = vsel %vm239, %v1199, %v1203
        %v1205 = vshrl.u32 %v836, 16
        %v1207 = vrot.slane %v1205, 4
        %v1208 = vor.u32 %v1207, %v1203
        %v1209 = vrot.slane %v1208, 4
        %v1211 = vshll.u32 %v853, 16
        %v1213 = vrot.slane %v1211, 5
        %v1214 = vsel %vm239, %v1209, %v1213
        %v1216 = vshrl.u32 %v837, 16
        %v1218 = vrot.slane %v1216, 4
        %v1219 = vshll.u32 %v837, 16
        %v1221 = vrot.slane %v1219, 5
        %v1222 = vor.u32 %v1218, %v1221
        %v1223 = vrot.slane %v1222, 4
        %v1225 = vshll.u32 %v838, 16
        %v1227 = vrot.slane %v1225, 5
        %v1228 = vsel %vm239, %v1223, %v1227
        %v1229 = vshrl.u32 %v838, 16
        %v1231 = vrot.slane %v1229, 4
        %v1232 = vor.u32 %v1231, %v1227
        %v1233 = vrot.slane %v1232, 4
        %v1235 = vshll.u32 %v854, 16
        %v1237 = vrot.slane %v1235, 5
        %v1238 = vsel %vm239, %v1233, %v1237
        %v1239 = vld [vmem:[%s806] sm:$0xe]
        %v1240 = vld [vmem:[%s806 + $0xc] sm:$0xe]
        %v1241 = vld [vmem:[%s806 + $0x18] sm:$0xe]
        %v1242 = vld [vmem:[%s806 + $0x24] sm:$0xe]
        %v1243 = vld [vmem:[%s806 + $0x30] sm:$0xe]
        %v1244 = vld [vmem:[%s806 + $0x3c] sm:$0xe]
        %v1245 = vld [vmem:[%s806 + $0x48] sm:$0xe]
        %v1246 = vld [vmem:[%s806 + $0x54] sm:$0xe]
        %v1247 = vld [vmem:[%s806 + $0x60] sm:$0xe]
        %v1248 = vld [vmem:[%s806 + $0x6c] sm:$0xe]
        %v1249 = vld [vmem:[%s806 + $0x78] sm:$0xe]
        %v1250 = vld [vmem:[%s806 + $0x84] sm:$0xe]
        %v1251 = vld [vmem:[%s806 + $0x90] sm:$0xe]
        %v1252 = vld [vmem:[%s806 + $0x9c] sm:$0xe]
        %v1253 = vld [vmem:[%s806 + $0xa8] sm:$0xe]
        %v1254 = vld [vmem:[%s806 + $0xb4] sm:$0xe]
        %v1303 = vrot.slane %v1239, 5
        %v1304 = vrot.slane %v1303, 4
        %v1305 = vrot.slane %v808, 5
        %v1306 = vsel %vm690, %v1304, %v1305
        %v1307 = vrot.slane %v1305, 4
        %v1308 = vrot.slane %v839, 5
        %v1309 = vsel %vm690, %v1307, %v1308
        %v1310 = vrot.slane %v1240, 5
        %v1311 = vrot.slane %v1310, 4
        %v1312 = vrot.slane %v810, 5
        %v1313 = vsel %vm690, %v1311, %v1312
        %v1314 = vrot.slane %v1312, 4
        %v1315 = vrot.slane %v840, 5
        %v1316 = vsel %vm690, %v1314, %v1315
        %v1317 = vrot.slane %v1241, 5
        %v1318 = vrot.slane %v1317, 4
        %v1319 = vrot.slane %v812, 5
        %v1320 = vsel %vm690, %v1318, %v1319
        %v1321 = vrot.slane %v1319, 4
        %v1322 = vrot.slane %v841, 5
        %v1323 = vsel %vm690, %v1321, %v1322
        %v1324 = vrot.slane %v1242, 5
        %v1325 = vrot.slane %v1324, 4
        %v1326 = vrot.slane %v814, 5
        %v1327 = vsel %vm690, %v1325, %v1326
        %v1328 = vrot.slane %v1326, 4
        %v1329 = vrot.slane %v842, 5
        %v1330 = vsel %vm690, %v1328, %v1329
        %v1331 = vrot.slane %v1243, 5
        %v1332 = vrot.slane %v1331, 4
        %v1333 = vrot.slane %v816, 5
        %v1334 = vsel %vm690, %v1332, %v1333
        %v1335 = vrot.slane %v1333, 4
        %v1336 = vrot.slane %v843, 5
        %v1337 = vsel %vm690, %v1335, %v1336
        %v1338 = vrot.slane %v1244, 5
        %v1339 = vrot.slane %v1338, 4
        %v1340 = vrot.slane %v818, 5
        %v1341 = vsel %vm690, %v1339, %v1340
        %v1342 = vrot.slane %v1340, 4
        %v1343 = vrot.slane %v844, 5
        %v1344 = vsel %vm690, %v1342, %v1343
        %v1345 = vrot.slane %v1245, 5
        %v1346 = vrot.slane %v1345, 4
        %v1347 = vrot.slane %v820, 5
        %v1348 = vsel %vm690, %v1346, %v1347
        %v1349 = vrot.slane %v1347, 4
        %v1350 = vrot.slane %v845, 5
        %v1351 = vsel %vm690, %v1349, %v1350
        %v1352 = vrot.slane %v1246, 5
        %v1353 = vrot.slane %v1352, 4
        %v1354 = vrot.slane %v822, 5
        %v1355 = vsel %vm690, %v1353, %v1354
        %v1356 = vrot.slane %v1354, 4
        %v1357 = vrot.slane %v846, 5
        %v1358 = vsel %vm690, %v1356, %v1357
        %v1359 = vrot.slane %v1247, 5
        %v1360 = vrot.slane %v1359, 4
        %v1361 = vrot.slane %v824, 5
        %v1362 = vsel %vm690, %v1360, %v1361
        %v1363 = vrot.slane %v1361, 4
        %v1364 = vrot.slane %v847, 5
        %v1365 = vsel %vm690, %v1363, %v1364
        %v1366 = vrot.slane %v1248, 5
        %v1367 = vrot.slane %v1366, 4
        %v1368 = vrot.slane %v826, 5
        %v1369 = vsel %vm690, %v1367, %v1368
        %v1370 = vrot.slane %v1368, 4
        %v1371 = vrot.slane %v848, 5
        %v1372 = vsel %vm690, %v1370, %v1371
        %v1373 = vrot.slane %v1249, 5
        %v1374 = vrot.slane %v1373, 4
        %v1375 = vrot.slane %v828, 5
        %v1376 = vsel %vm690, %v1374, %v1375
        %v1377 = vrot.slane %v1375, 4
        %v1378 = vrot.slane %v849, 5
        %v1379 = vsel %vm690, %v1377, %v1378
        %v1380 = vrot.slane %v1250, 5
        %v1381 = vrot.slane %v1380, 4
        %v1382 = vrot.slane %v830, 5
        %v1383 = vsel %vm690, %v1381, %v1382
        %v1384 = vrot.slane %v1382, 4
        %v1385 = vrot.slane %v850, 5
        %v1386 = vsel %vm690, %v1384, %v1385
        %v1387 = vrot.slane %v1251, 5
        %v1388 = vrot.slane %v1387, 4
        %v1389 = vrot.slane %v832, 5
        %v1390 = vsel %vm690, %v1388, %v1389
        %v1391 = vrot.slane %v1389, 4
        %v1392 = vrot.slane %v851, 5
        %v1393 = vsel %vm690, %v1391, %v1392
        %v1394 = vrot.slane %v1252, 5
        %v1395 = vrot.slane %v1394, 4
        %v1396 = vrot.slane %v834, 5
        %v1397 = vsel %vm690, %v1395, %v1396
        %v1398 = vrot.slane %v1396, 4
        %v1399 = vrot.slane %v852, 5
        %v1400 = vsel %vm690, %v1398, %v1399
        %v1401 = vrot.slane %v1253, 5
        %v1402 = vrot.slane %v1401, 4
        %v1403 = vrot.slane %v836, 5
        %v1404 = vsel %vm690, %v1402, %v1403
        %v1405 = vrot.slane %v1403, 4
        %v1406 = vrot.slane %v853, 5
        %v1407 = vsel %vm690, %v1405, %v1406
        %v1408 = vrot.slane %v1254, 5
        %v1409 = vrot.slane %v1408, 4
        %v1410 = vrot.slane %v838, 5
        %v1411 = vsel %vm690, %v1409, %v1410
        %v1412 = vrot.slane %v1410, 4
        %v1413 = vrot.slane %v854, 5
        %v1414 = vsel %vm690, %v1412, %v1413
        %s1415 = sadd.s32 %s185, 2
        %s1416 = smul.u32 %s1415, 3
        %s1417 = smul.addr %s1416, 4
        %s1418 = scalar_lea.vmem %s182, %s1417
        %v1419 = vld [vmem:[%s1418] sm:$0xf]
        %v1420 = vld [vmem:[%s1418 + $0x4] sm:$0xf]
        %v1421 = vld [vmem:[%s1418 + $0xc] sm:$0xf]
        %v1422 = vld [vmem:[%s1418 + $0x10] sm:$0xf]
        %v1423 = vld [vmem:[%s1418 + $0x18] sm:$0xf]
        %v1424 = vld [vmem:[%s1418 + $0x1c] sm:$0xf]
        %v1425 = vld [vmem:[%s1418 + $0x24] sm:$0xf]
        %v1426 = vld [vmem:[%s1418 + $0x28] sm:$0xf]
        %v1427 = vld [vmem:[%s1418 + $0x30] sm:$0xf]
        %v1428 = vld [vmem:[%s1418 + $0x34] sm:$0xf]
        %v1429 = vld [vmem:[%s1418 + $0x3c] sm:$0xf]
        %v1430 = vld [vmem:[%s1418 + $0x40] sm:$0xf]
        %v1431 = vld [vmem:[%s1418 + $0x48] sm:$0xf]
        %v1432 = vld [vmem:[%s1418 + $0x4c] sm:$0xf]
        %v1433 = vld [vmem:[%s1418 + $0x54] sm:$0xf]
        %v1434 = vld [vmem:[%s1418 + $0x58] sm:$0xf]
        %v1435 = vld [vmem:[%s1418 + $0x60] sm:$0xf]
        %v1436 = vld [vmem:[%s1418 + $0x64] sm:$0xf]
        %v1437 = vld [vmem:[%s1418 + $0x6c] sm:$0xf]
        %v1438 = vld [vmem:[%s1418 + $0x70] sm:$0xf]
        %v1439 = vld [vmem:[%s1418 + $0x78] sm:$0xf]
        %v1440 = vld [vmem:[%s1418 + $0x7c] sm:$0xf]
        %v1441 = vld [vmem:[%s1418 + $0x84] sm:$0xf]
        %v1442 = vld [vmem:[%s1418 + $0x88] sm:$0xf]
        %v1443 = vld [vmem:[%s1418 + $0x90] sm:$0xf]
        %v1444 = vld [vmem:[%s1418 + $0x94] sm:$0xf]
        %v1445 = vld [vmem:[%s1418 + $0x9c] sm:$0xf]
        %v1446 = vld [vmem:[%s1418 + $0xa0] sm:$0xf]
        %v1447 = vld [vmem:[%s1418 + $0xa8] sm:$0xf]
        %v1448 = vld [vmem:[%s1418 + $0xac] sm:$0xf]
        %v1449 = vld [vmem:[%s1418 + $0xb4] sm:$0xf]
        %v1450 = vld [vmem:[%s1418 + $0xb8] sm:$0xf]
        %v1451 = vld [vmem:[%s1418 + $0x8] sm:$0x1]
        %v1452 = vld [vmem:[%s1418 + $0x14] sm:$0x1]
        %v1453 = vld [vmem:[%s1418 + $0x20] sm:$0x1]
        %v1454 = vld [vmem:[%s1418 + $0x2c] sm:$0x1]
        %v1455 = vld [vmem:[%s1418 + $0x38] sm:$0x1]
        %v1456 = vld [vmem:[%s1418 + $0x44] sm:$0x1]
        %v1457 = vld [vmem:[%s1418 + $0x50] sm:$0x1]
        %v1458 = vld [vmem:[%s1418 + $0x5c] sm:$0x1]
        %v1459 = vld [vmem:[%s1418 + $0x68] sm:$0x1]
        %v1460 = vld [vmem:[%s1418 + $0x74] sm:$0x1]
        %v1461 = vld [vmem:[%s1418 + $0x80] sm:$0x1]
        %v1462 = vld [vmem:[%s1418 + $0x8c] sm:$0x1]
        %v1463 = vld [vmem:[%s1418 + $0x98] sm:$0x1]
        %v1464 = vld [vmem:[%s1418 + $0xa4] sm:$0x1]
        %v1465 = vld [vmem:[%s1418 + $0xb0] sm:$0x1]
        %v1466 = vld [vmem:[%s1418 + $0xbc] sm:$0x1]
        %v1468 = vshrl.u32 %v1419, 16
        %v1470 = vrot.slane %v1468, 4
        %v1471 = vshll.u32 %v1419, 16
        %v1473 = vrot.slane %v1471, 5
        %v1474 = vor.u32 %v1470, %v1473
        %v1475 = vrot.slane %v1474, 4
        %v1477 = vshll.u32 %v1420, 16
        %v1479 = vrot.slane %v1477, 5
        %v1480 = vsel %vm239, %v1475, %v1479
        %v1481 = vshrl.u32 %v1420, 16
        %v1483 = vrot.slane %v1481, 4
        %v1484 = vor.u32 %v1483, %v1479
        %v1485 = vrot.slane %v1484, 4
        %v1487 = vshll.u32 %v1451, 16
        %v1489 = vrot.slane %v1487, 5
        %v1490 = vsel %vm239, %v1485, %v1489
        %v1492 = vshrl.u32 %v1421, 16
        %v1494 = vrot.slane %v1492, 4
        %v1495 = vshll.u32 %v1421, 16
        %v1497 = vrot.slane %v1495, 5
        %v1498 = vor.u32 %v1494, %v1497
        %v1499 = vrot.slane %v1498, 4
        %v1501 = vshll.u32 %v1422, 16
        %v1503 = vrot.slane %v1501, 5
        %v1504 = vsel %vm239, %v1499, %v1503
        %v1505 = vshrl.u32 %v1422, 16
        %v1507 = vrot.slane %v1505, 4
        %v1508 = vor.u32 %v1507, %v1503
        %v1509 = vrot.slane %v1508, 4
        %v1511 = vshll.u32 %v1452, 16
        %v1513 = vrot.slane %v1511, 5
        %v1514 = vsel %vm239, %v1509, %v1513
        %v1516 = vshrl.u32 %v1423, 16
        %v1518 = vrot.slane %v1516, 4
        %v1519 = vshll.u32 %v1423, 16
        %v1521 = vrot.slane %v1519, 5
        %v1522 = vor.u32 %v1518, %v1521
        %v1523 = vrot.slane %v1522, 4
        %v1525 = vshll.u32 %v1424, 16
        %v1527 = vrot.slane %v1525, 5
        %v1528 = vsel %vm239, %v1523, %v1527
        %v1529 = vshrl.u32 %v1424, 16
        %v1531 = vrot.slane %v1529, 4
        %v1532 = vor.u32 %v1531, %v1527
        %v1533 = vrot.slane %v1532, 4
        %v1535 = vshll.u32 %v1453, 16
        %v1537 = vrot.slane %v1535, 5
        %v1538 = vsel %vm239, %v1533, %v1537
        %v1540 = vshrl.u32 %v1425, 16
        %v1542 = vrot.slane %v1540, 4
        %v1543 = vshll.u32 %v1425, 16
        %v1545 = vrot.slane %v1543, 5
        %v1546 = vor.u32 %v1542, %v1545
        %v1547 = vrot.slane %v1546, 4
        %v1549 = vshll.u32 %v1426, 16
        %v1551 = vrot.slane %v1549, 5
        %v1552 = vsel %vm239, %v1547, %v1551
        %v1553 = vshrl.u32 %v1426, 16
        %v1555 = vrot.slane %v1553, 4
        %v1556 = vor.u32 %v1555, %v1551
        %v1557 = vrot.slane %v1556, 4
        %v1559 = vshll.u32 %v1454, 16
        %v1561 = vrot.slane %v1559, 5
        %v1562 = vsel %vm239, %v1557, %v1561
        %v1564 = vshrl.u32 %v1427, 16
        %v1566 = vrot.slane %v1564, 4
        %v1567 = vshll.u32 %v1427, 16
        %v1569 = vrot.slane %v1567, 5
        %v1570 = vor.u32 %v1566, %v1569
        %v1571 = vrot.slane %v1570, 4
        %v1573 = vshll.u32 %v1428, 16
        %v1575 = vrot.slane %v1573, 5
        %v1576 = vsel %vm239, %v1571, %v1575
        %v1577 = vshrl.u32 %v1428, 16
        %v1579 = vrot.slane %v1577, 4
        %v1580 = vor.u32 %v1579, %v1575
        %v1581 = vrot.slane %v1580, 4
        %v1583 = vshll.u32 %v1455, 16
        %v1585 = vrot.slane %v1583, 5
        %v1586 = vsel %vm239, %v1581, %v1585
        %v1588 = vshrl.u32 %v1429, 16
        %v1590 = vrot.slane %v1588, 4
        %v1591 = vshll.u32 %v1429, 16
        %v1593 = vrot.slane %v1591, 5
        %v1594 = vor.u32 %v1590, %v1593
        %v1595 = vrot.slane %v1594, 4
        %v1597 = vshll.u32 %v1430, 16
        %v1599 = vrot.slane %v1597, 5
        %v1600 = vsel %vm239, %v1595, %v1599
        %v1601 = vshrl.u32 %v1430, 16
        %v1603 = vrot.slane %v1601, 4
        %v1604 = vor.u32 %v1603, %v1599
        %v1605 = vrot.slane %v1604, 4
        %v1607 = vshll.u32 %v1456, 16
        %v1609 = vrot.slane %v1607, 5
        %v1610 = vsel %vm239, %v1605, %v1609
        %v1612 = vshrl.u32 %v1431, 16
        %v1614 = vrot.slane %v1612, 4
        %v1615 = vshll.u32 %v1431, 16
        %v1617 = vrot.slane %v1615, 5
        %v1618 = vor.u32 %v1614, %v1617
        %v1619 = vrot.slane %v1618, 4
        %v1621 = vshll.u32 %v1432, 16
        %v1623 = vrot.slane %v1621, 5
        %v1624 = vsel %vm239, %v1619, %v1623
        %v1625 = vshrl.u32 %v1432, 16
        %v1627 = vrot.slane %v1625, 4
        %v1628 = vor.u32 %v1627, %v1623
        %v1629 = vrot.slane %v1628, 4
        %v1631 = vshll.u32 %v1457, 16
        %v1633 = vrot.slane %v1631, 5
        %v1634 = vsel %vm239, %v1629, %v1633
        %v1636 = vshrl.u32 %v1433, 16
        %v1638 = vrot.slane %v1636, 4
        %v1639 = vshll.u32 %v1433, 16
        %v1641 = vrot.slane %v1639, 5
        %v1642 = vor.u32 %v1638, %v1641
        %v1643 = vrot.slane %v1642, 4
        %v1645 = vshll.u32 %v1434, 16
        %v1647 = vrot.slane %v1645, 5
        %v1648 = vsel %vm239, %v1643, %v1647
        %v1649 = vshrl.u32 %v1434, 16
        %v1651 = vrot.slane %v1649, 4
        %v1652 = vor.u32 %v1651, %v1647
        %v1653 = vrot.slane %v1652, 4
        %v1655 = vshll.u32 %v1458, 16
        %v1657 = vrot.slane %v1655, 5
        %v1658 = vsel %vm239, %v1653, %v1657
        %v1660 = vshrl.u32 %v1435, 16
        %v1662 = vrot.slane %v1660, 4
        %v1663 = vshll.u32 %v1435, 16
        %v1665 = vrot.slane %v1663, 5
        %v1666 = vor.u32 %v1662, %v1665
        %v1667 = vrot.slane %v1666, 4
        %v1669 = vshll.u32 %v1436, 16
        %v1671 = vrot.slane %v1669, 5
        %v1672 = vsel %vm239, %v1667, %v1671
        %v1673 = vshrl.u32 %v1436, 16
        %v1675 = vrot.slane %v1673, 4
        %v1676 = vor.u32 %v1675, %v1671
        %v1677 = vrot.slane %v1676, 4
        %v1679 = vshll.u32 %v1459, 16
        %v1681 = vrot.slane %v1679, 5
        %v1682 = vsel %vm239, %v1677, %v1681
        %v1684 = vshrl.u32 %v1437, 16
        %v1686 = vrot.slane %v1684, 4
        %v1687 = vshll.u32 %v1437, 16
        %v1689 = vrot.slane %v1687, 5
        %v1690 = vor.u32 %v1686, %v1689
        %v1691 = vrot.slane %v1690, 4
        %v1693 = vshll.u32 %v1438, 16
        %v1695 = vrot.slane %v1693, 5
        %v1696 = vsel %vm239, %v1691, %v1695
        %v1697 = vshrl.u32 %v1438, 16
        %v1699 = vrot.slane %v1697, 4
        %v1700 = vor.u32 %v1699, %v1695
        %v1701 = vrot.slane %v1700, 4
        %v1703 = vshll.u32 %v1460, 16
        %v1705 = vrot.slane %v1703, 5
        %v1706 = vsel %vm239, %v1701, %v1705
        %v1708 = vshrl.u32 %v1439, 16
        %v1710 = vrot.slane %v1708, 4
        %v1711 = vshll.u32 %v1439, 16
        %v1713 = vrot.slane %v1711, 5
        %v1714 = vor.u32 %v1710, %v1713
        %v1715 = vrot.slane %v1714, 4
        %v1717 = vshll.u32 %v1440, 16
        %v1719 = vrot.slane %v1717, 5
        %v1720 = vsel %vm239, %v1715, %v1719
        %v1721 = vshrl.u32 %v1440, 16
        %v1723 = vrot.slane %v1721, 4
        %v1724 = vor.u32 %v1723, %v1719
        %v1725 = vrot.slane %v1724, 4
        %v1727 = vshll.u32 %v1461, 16
        %v1729 = vrot.slane %v1727, 5
        %v1730 = vsel %vm239, %v1725, %v1729
        %v1732 = vshrl.u32 %v1441, 16
        %v1734 = vrot.slane %v1732, 4
        %v1735 = vshll.u32 %v1441, 16
        %v1737 = vrot.slane %v1735, 5
        %v1738 = vor.u32 %v1734, %v1737
        %v1739 = vrot.slane %v1738, 4
        %v1741 = vshll.u32 %v1442, 16
        %v1743 = vrot.slane %v1741, 5
        %v1744 = vsel %vm239, %v1739, %v1743
        %v1745 = vshrl.u32 %v1442, 16
        %v1747 = vrot.slane %v1745, 4
        %v1748 = vor.u32 %v1747, %v1743
        %v1749 = vrot.slane %v1748, 4
        %v1751 = vshll.u32 %v1462, 16
        %v1753 = vrot.slane %v1751, 5
        %v1754 = vsel %vm239, %v1749, %v1753
        %v1756 = vshrl.u32 %v1443, 16
        %v1758 = vrot.slane %v1756, 4
        %v1759 = vshll.u32 %v1443, 16
        %v1761 = vrot.slane %v1759, 5
        %v1762 = vor.u32 %v1758, %v1761
        %v1763 = vrot.slane %v1762, 4
        %v1765 = vshll.u32 %v1444, 16
        %v1767 = vrot.slane %v1765, 5
        %v1768 = vsel %vm239, %v1763, %v1767
        %v1769 = vshrl.u32 %v1444, 16
        %v1771 = vrot.slane %v1769, 4
        %v1772 = vor.u32 %v1771, %v1767
        %v1773 = vrot.slane %v1772, 4
        %v1775 = vshll.u32 %v1463, 16
        %v1777 = vrot.slane %v1775, 5
        %v1778 = vsel %vm239, %v1773, %v1777
        %v1780 = vshrl.u32 %v1445, 16
        %v1782 = vrot.slane %v1780, 4
        %v1783 = vshll.u32 %v1445, 16
        %v1785 = vrot.slane %v1783, 5
        %v1786 = vor.u32 %v1782, %v1785
        %v1787 = vrot.slane %v1786, 4
        %v1789 = vshll.u32 %v1446, 16
        %v1791 = vrot.slane %v1789, 5
        %v1792 = vsel %vm239, %v1787, %v1791
        %v1793 = vshrl.u32 %v1446, 16
        %v1795 = vrot.slane %v1793, 4
        %v1796 = vor.u32 %v1795, %v1791
        %v1797 = vrot.slane %v1796, 4
        %v1799 = vshll.u32 %v1464, 16
        %v1801 = vrot.slane %v1799, 5
        %v1802 = vsel %vm239, %v1797, %v1801
        %v1804 = vshrl.u32 %v1447, 16
        %v1806 = vrot.slane %v1804, 4
        %v1807 = vshll.u32 %v1447, 16
        %v1809 = vrot.slane %v1807, 5
        %v1810 = vor.u32 %v1806, %v1809
        %v1811 = vrot.slane %v1810, 4
        %v1813 = vshll.u32 %v1448, 16
        %v1815 = vrot.slane %v1813, 5
        %v1816 = vsel %vm239, %v1811, %v1815
        %v1817 = vshrl.u32 %v1448, 16
        %v1819 = vrot.slane %v1817, 4
        %v1820 = vor.u32 %v1819, %v1815
        %v1821 = vrot.slane %v1820, 4
        %v1823 = vshll.u32 %v1465, 16
        %v1825 = vrot.slane %v1823, 5
        %v1826 = vsel %vm239, %v1821, %v1825
        %v1828 = vshrl.u32 %v1449, 16
        %v1830 = vrot.slane %v1828, 4
        %v1831 = vshll.u32 %v1449, 16
        %v1833 = vrot.slane %v1831, 5
        %v1834 = vor.u32 %v1830, %v1833
        %v1835 = vrot.slane %v1834, 4
        %v1837 = vshll.u32 %v1450, 16
        %v1839 = vrot.slane %v1837, 5
        %v1840 = vsel %vm239, %v1835, %v1839
        %v1841 = vshrl.u32 %v1450, 16
        %v1843 = vrot.slane %v1841, 4
        %v1844 = vor.u32 %v1843, %v1839
        %v1845 = vrot.slane %v1844, 4
        %v1847 = vshll.u32 %v1466, 16
        %v1849 = vrot.slane %v1847, 5
        %v1850 = vsel %vm239, %v1845, %v1849
        %v1851 = vld [vmem:[%s1418] sm:$0xe]
        %v1852 = vld [vmem:[%s1418 + $0xc] sm:$0xe]
        %v1853 = vld [vmem:[%s1418 + $0x18] sm:$0xe]
        %v1854 = vld [vmem:[%s1418 + $0x24] sm:$0xe]
        %v1855 = vld [vmem:[%s1418 + $0x30] sm:$0xe]
        %v1856 = vld [vmem:[%s1418 + $0x3c] sm:$0xe]
        %v1857 = vld [vmem:[%s1418 + $0x48] sm:$0xe]
        %v1858 = vld [vmem:[%s1418 + $0x54] sm:$0xe]
        %v1859 = vld [vmem:[%s1418 + $0x60] sm:$0xe]
        %v1860 = vld [vmem:[%s1418 + $0x6c] sm:$0xe]
        %v1861 = vld [vmem:[%s1418 + $0x78] sm:$0xe]
        %v1862 = vld [vmem:[%s1418 + $0x84] sm:$0xe]
        %v1863 = vld [vmem:[%s1418 + $0x90] sm:$0xe]
        %v1864 = vld [vmem:[%s1418 + $0x9c] sm:$0xe]
        %v1865 = vld [vmem:[%s1418 + $0xa8] sm:$0xe]
        %v1866 = vld [vmem:[%s1418 + $0xb4] sm:$0xe]
        %v1915 = vrot.slane %v1851, 5
        %v1916 = vrot.slane %v1915, 4
        %v1917 = vrot.slane %v1420, 5
        %v1918 = vsel %vm690, %v1916, %v1917
        %v1919 = vrot.slane %v1917, 4
        %v1920 = vrot.slane %v1451, 5
        %v1921 = vsel %vm690, %v1919, %v1920
        %v1922 = vrot.slane %v1852, 5
        %v1923 = vrot.slane %v1922, 4
        %v1924 = vrot.slane %v1422, 5
        %v1925 = vsel %vm690, %v1923, %v1924
        %v1926 = vrot.slane %v1924, 4
        %v1927 = vrot.slane %v1452, 5
        %v1928 = vsel %vm690, %v1926, %v1927
        %v1929 = vrot.slane %v1853, 5
        %v1930 = vrot.slane %v1929, 4
        %v1931 = vrot.slane %v1424, 5
        %v1932 = vsel %vm690, %v1930, %v1931
        %v1933 = vrot.slane %v1931, 4
        %v1934 = vrot.slane %v1453, 5
        %v1935 = vsel %vm690, %v1933, %v1934
        %v1936 = vrot.slane %v1854, 5
        %v1937 = vrot.slane %v1936, 4
        %v1938 = vrot.slane %v1426, 5
        %v1939 = vsel %vm690, %v1937, %v1938
        %v1940 = vrot.slane %v1938, 4
        %v1941 = vrot.slane %v1454, 5
        %v1942 = vsel %vm690, %v1940, %v1941
        %v1943 = vrot.slane %v1855, 5
        %v1944 = vrot.slane %v1943, 4
        %v1945 = vrot.slane %v1428, 5
        %v1946 = vsel %vm690, %v1944, %v1945
        %v1947 = vrot.slane %v1945, 4
        %v1948 = vrot.slane %v1455, 5
        %v1949 = vsel %vm690, %v1947, %v1948
        %v1950 = vrot.slane %v1856, 5
        %v1951 = vrot.slane %v1950, 4
        %v1952 = vrot.slane %v1430, 5
        %v1953 = vsel %vm690, %v1951, %v1952
        %v1954 = vrot.slane %v1952, 4
        %v1955 = vrot.slane %v1456, 5
        %v1956 = vsel %vm690, %v1954, %v1955
        %v1957 = vrot.slane %v1857, 5
        %v1958 = vrot.slane %v1957, 4
        %v1959 = vrot.slane %v1432, 5
        %v1960 = vsel %vm690, %v1958, %v1959
        %v1961 = vrot.slane %v1959, 4
        %v1962 = vrot.slane %v1457, 5
        %v1963 = vsel %vm690, %v1961, %v1962
        %v1964 = vrot.slane %v1858, 5
        %v1965 = vrot.slane %v1964, 4
        %v1966 = vrot.slane %v1434, 5
        %v1967 = vsel %vm690, %v1965, %v1966
        %v1968 = vrot.slane %v1966, 4
        %v1969 = vrot.slane %v1458, 5
        %v1970 = vsel %vm690, %v1968, %v1969
        %v1971 = vrot.slane %v1859, 5
        %v1972 = vrot.slane %v1971, 4
        %v1973 = vrot.slane %v1436, 5
        %v1974 = vsel %vm690, %v1972, %v1973
        %v1975 = vrot.slane %v1973, 4
        %v1976 = vrot.slane %v1459, 5
        %v1977 = vsel %vm690, %v1975, %v1976
        %v1978 = vrot.slane %v1860, 5
        %v1979 = vrot.slane %v1978, 4
        %v1980 = vrot.slane %v1438, 5
        %v1981 = vsel %vm690, %v1979, %v1980
        %v1982 = vrot.slane %v1980, 4
        %v1983 = vrot.slane %v1460, 5
        %v1984 = vsel %vm690, %v1982, %v1983
        %v1985 = vrot.slane %v1861, 5
        %v1986 = vrot.slane %v1985, 4
        %v1987 = vrot.slane %v1440, 5
        %v1988 = vsel %vm690, %v1986, %v1987
        %v1989 = vrot.slane %v1987, 4
        %v1990 = vrot.slane %v1461, 5
        %v1991 = vsel %vm690, %v1989, %v1990
        %v1992 = vrot.slane %v1862, 5
        %v1993 = vrot.slane %v1992, 4
        %v1994 = vrot.slane %v1442, 5
        %v1995 = vsel %vm690, %v1993, %v1994
        %v1996 = vrot.slane %v1994, 4
        %v1997 = vrot.slane %v1462, 5
        %v1998 = vsel %vm690, %v1996, %v1997
        %v1999 = vrot.slane %v1863, 5
        %v2000 = vrot.slane %v1999, 4
        %v2001 = vrot.slane %v1444, 5
        %v2002 = vsel %vm690, %v2000, %v2001
        %v2003 = vrot.slane %v2001, 4
        %v2004 = vrot.slane %v1463, 5
        %v2005 = vsel %vm690, %v2003, %v2004
        %v2006 = vrot.slane %v1864, 5
        %v2007 = vrot.slane %v2006, 4
        %v2008 = vrot.slane %v1446, 5
        %v2009 = vsel %vm690, %v2007, %v2008
        %v2010 = vrot.slane %v2008, 4
        %v2011 = vrot.slane %v1464, 5
        %v2012 = vsel %vm690, %v2010, %v2011
        %v2013 = vrot.slane %v1865, 5
        %v2014 = vrot.slane %v2013, 4
        %v2015 = vrot.slane %v1448, 5
        %v2016 = vsel %vm690, %v2014, %v2015
        %v2017 = vrot.slane %v2015, 4
        %v2018 = vrot.slane %v1465, 5
        %v2019 = vsel %vm690, %v2017, %v2018
        %v2020 = vrot.slane %v1866, 5
        %v2021 = vrot.slane %v2020, 4
        %v2022 = vrot.slane %v1450, 5
        %v2023 = vsel %vm690, %v2021, %v2022
        %v2024 = vrot.slane %v2022, 4
        %v2025 = vrot.slane %v1466, 5
        %v2026 = vsel %vm690, %v2024, %v2025
        %v2027 = vld [vmem:[%s2] sm:$0xff]
        %v2044 = vunpack.c.l.b16 %v189
        %v2045 = vunpack.c.l.b16 %v190
        %v2046 = vunpack.c.l.b16 %v191
        %v2047 = vunpack.c.l.b16 %v192
        %v2048 = vunpack.c.l.b16 %v193
        %v2049 = vunpack.c.l.b16 %v194
        %v2050 = vunpack.c.l.b16 %v195
        %v2051 = vunpack.c.l.b16 %v196
        %v2052 = vunpack.c.l.b16 %v197
        %v2053 = vunpack.c.l.b16 %v198
        %v2054 = vunpack.c.l.b16 %v199
        %v2055 = vunpack.c.l.b16 %v200
        %v2056 = vunpack.c.l.b16 %v201
        %v2057 = vunpack.c.l.b16 %v202
        %v2058 = vunpack.c.l.b16 %v203
        %v2059 = vunpack.c.l.b16 %v204
        %v2060 = vunpack.c.l.b16 %v205
        %v2061 = vunpack.c.l.b16 %v206
        %v2062 = vunpack.c.l.b16 %v207
        %v2063 = vunpack.c.l.b16 %v208
        %v2064 = vunpack.c.l.b16 %v209
        %v2065 = vunpack.c.l.b16 %v210
        %v2066 = vunpack.c.l.b16 %v211
        %v2067 = vunpack.c.l.b16 %v212
        %v2068 = vunpack.c.l.b16 %v213
        %v2069 = vunpack.c.l.b16 %v214
        %v2070 = vunpack.c.l.b16 %v215
        %v2071 = vunpack.c.l.b16 %v216
        %v2072 = vunpack.c.l.b16 %v217
        %v2073 = vunpack.c.l.b16 %v218
        %v2074 = vunpack.c.l.b16 %v219
        %v2075 = vunpack.c.l.b16 %v220
        %v2076 = vpack.c.b16 %v2045, %v2044
        %v2077 = vpack.c.b16 %v2047, %v2046
        %v2078 = vpack.c.b16 %v2049, %v2048
        %v2079 = vpack.c.b16 %v2051, %v2050
        %v2080 = vpack.c.b16 %v2053, %v2052
        %v2081 = vpack.c.b16 %v2055, %v2054
        %v2082 = vpack.c.b16 %v2057, %v2056
        %v2083 = vpack.c.b16 %v2059, %v2058
        %v2084 = vpack.c.b16 %v2061, %v2060
        %v2085 = vpack.c.b16 %v2063, %v2062
        %v2086 = vpack.c.b16 %v2065, %v2064
        %v2087 = vpack.c.b16 %v2067, %v2066
        %v2088 = vpack.c.b16 %v2069, %v2068
        %v2089 = vpack.c.b16 %v2071, %v2070
        %v2090 = vpack.c.b16 %v2073, %v2072
        %v2091 = vpack.c.b16 %v2075, %v2074
        %v2092 = vunpack.c.l.b16 %v253
        %v2093 = vunpack.c.l.b16 %v263
        %v2094 = vunpack.c.l.b16 %v277
        %v2095 = vunpack.c.l.b16 %v287
        %v2096 = vunpack.c.l.b16 %v301
        %v2097 = vunpack.c.l.b16 %v311
        %v2098 = vunpack.c.l.b16 %v325
        %v2099 = vunpack.c.l.b16 %v335
        %v2100 = vunpack.c.l.b16 %v349
        %v2101 = vunpack.c.l.b16 %v359
        %v2102 = vunpack.c.l.b16 %v373
        %v2103 = vunpack.c.l.b16 %v383
        %v2104 = vunpack.c.l.b16 %v397
        %v2105 = vunpack.c.l.b16 %v407
        %v2106 = vunpack.c.l.b16 %v421
        %v2107 = vunpack.c.l.b16 %v431
        %v2108 = vunpack.c.l.b16 %v445
        %v2109 = vunpack.c.l.b16 %v455
        %v2110 = vunpack.c.l.b16 %v469
        %v2111 = vunpack.c.l.b16 %v479
        %v2112 = vunpack.c.l.b16 %v493
        %v2113 = vunpack.c.l.b16 %v503
        %v2114 = vunpack.c.l.b16 %v517
        %v2115 = vunpack.c.l.b16 %v527
        %v2116 = vunpack.c.l.b16 %v541
        %v2117 = vunpack.c.l.b16 %v551
        %v2118 = vunpack.c.l.b16 %v565
        %v2119 = vunpack.c.l.b16 %v575
        %v2120 = vunpack.c.l.b16 %v589
        %v2121 = vunpack.c.l.b16 %v599
        %v2122 = vunpack.c.l.b16 %v613
        %v2123 = vunpack.c.l.b16 %v623
        %v2124 = vpack.c.b16 %v2093, %v2092
        %v2125 = vpack.c.b16 %v2095, %v2094
        %v2126 = vpack.c.b16 %v2097, %v2096
        %v2127 = vpack.c.b16 %v2099, %v2098
        %v2128 = vpack.c.b16 %v2101, %v2100
        %v2129 = vpack.c.b16 %v2103, %v2102
        %v2130 = vpack.c.b16 %v2105, %v2104
        %v2131 = vpack.c.b16 %v2107, %v2106
        %v2132 = vpack.c.b16 %v2109, %v2108
        %v2133 = vpack.c.b16 %v2111, %v2110
        %v2134 = vpack.c.b16 %v2113, %v2112
        %v2135 = vpack.c.b16 %v2115, %v2114
        %v2136 = vpack.c.b16 %v2117, %v2116
        %v2137 = vpack.c.b16 %v2119, %v2118
        %v2138 = vpack.c.b16 %v2121, %v2120
        %v2139 = vpack.c.b16 %v2123, %v2122
        %2140 = vrot.lane.b32.xlu0 %v2124, 4
        %v2141 = vpop.permute.xlu0 %2140
        %2142 = vrot.lane.b32.xlu0 %v2125, 4
        %v2143 = vpop.permute.xlu0 %2142
        %2144 = vrot.lane.b32.xlu0 %v2126, 4
        %v2145 = vpop.permute.xlu0 %2144
        %2146 = vrot.lane.b32.xlu0 %v2127, 4
        %v2147 = vpop.permute.xlu0 %2146
        %2148 = vrot.lane.b32.xlu0 %v2128, 4
        %v2149 = vpop.permute.xlu0 %2148
        %2150 = vrot.lane.b32.xlu0 %v2129, 4
        %v2151 = vpop.permute.xlu0 %2150
        %2152 = vrot.lane.b32.xlu0 %v2130, 4
        %v2153 = vpop.permute.xlu0 %2152
        %2154 = vrot.lane.b32.xlu0 %v2131, 4
        %v2155 = vpop.permute.xlu0 %2154
        %2156 = vrot.lane.b32.xlu0 %v2132, 4
        %v2157 = vpop.permute.xlu0 %2156
        %2158 = vrot.lane.b32.xlu0 %v2133, 4
        %v2159 = vpop.permute.xlu0 %2158
        %2160 = vrot.lane.b32.xlu0 %v2134, 4
        %v2161 = vpop.permute.xlu0 %2160
        %2162 = vrot.lane.b32.xlu0 %v2135, 4
        %v2163 = vpop.permute.xlu0 %2162
        %2164 = vrot.lane.b32.xlu0 %v2136, 4
        %v2165 = vpop.permute.xlu0 %2164
        %2166 = vrot.lane.b32.xlu0 %v2137, 4
        %v2167 = vpop.permute.xlu0 %2166
        %2168 = vrot.lane.b32.xlu0 %v2138, 4
        %v2169 = vpop.permute.xlu0 %2168
        %2170 = vrot.lane.b32.xlu0 %v2139, 4
        %v2171 = vpop.permute.xlu0 %2170
        %v2188 = vunpack.c.l.b16 %v807
        %v2189 = vunpack.c.l.b16 %v808
        %v2190 = vunpack.c.l.b16 %v809
        %v2191 = vunpack.c.l.b16 %v810
        %v2192 = vunpack.c.l.b16 %v811
        %v2193 = vunpack.c.l.b16 %v812
        %v2194 = vunpack.c.l.b16 %v813
        %v2195 = vunpack.c.l.b16 %v814
        %v2196 = vunpack.c.l.b16 %v815
        %v2197 = vunpack.c.l.b16 %v816
        %v2198 = vunpack.c.l.b16 %v817
        %v2199 = vunpack.c.l.b16 %v818
        %v2200 = vunpack.c.l.b16 %v819
        %v2201 = vunpack.c.l.b16 %v820
        %v2202 = vunpack.c.l.b16 %v821
        %v2203 = vunpack.c.l.b16 %v822
        %v2204 = vunpack.c.l.b16 %v823
        %v2205 = vunpack.c.l.b16 %v824
        %v2206 = vunpack.c.l.b16 %v825
        %v2207 = vunpack.c.l.b16 %v826
        %v2208 = vunpack.c.l.b16 %v827
        %v2209 = vunpack.c.l.b16 %v828
        %v2210 = vunpack.c.l.b16 %v829
        %v2211 = vunpack.c.l.b16 %v830
        %v2212 = vunpack.c.l.b16 %v831
        %v2213 = vunpack.c.l.b16 %v832
        %v2214 = vunpack.c.l.b16 %v833
        %v2215 = vunpack.c.l.b16 %v834
        %v2216 = vunpack.c.l.b16 %v835
        %v2217 = vunpack.c.l.b16 %v836
        %v2218 = vunpack.c.l.b16 %v837
        %v2219 = vunpack.c.l.b16 %v838
        %v2220 = vpack.c.b16 %v2189, %v2188
        %v2221 = vpack.c.b16 %v2191, %v2190
        %v2222 = vpack.c.b16 %v2193, %v2192
        %v2223 = vpack.c.b16 %v2195, %v2194
        %v2224 = vpack.c.b16 %v2197, %v2196
        %v2225 = vpack.c.b16 %v2199, %v2198
        %v2226 = vpack.c.b16 %v2201, %v2200
        %v2227 = vpack.c.b16 %v2203, %v2202
        %v2228 = vpack.c.b16 %v2205, %v2204
        %v2229 = vpack.c.b16 %v2207, %v2206
        %v2230 = vpack.c.b16 %v2209, %v2208
        %v2231 = vpack.c.b16 %v2211, %v2210
        %v2232 = vpack.c.b16 %v2213, %v2212
        %v2233 = vpack.c.b16 %v2215, %v2214
        %v2234 = vpack.c.b16 %v2217, %v2216
        %v2235 = vpack.c.b16 %v2219, %v2218
        %2236 = vrot.lane.b32.xlu0 %v2220, 8
        %v2237 = vpop.permute.xlu0 %2236
        %2238 = vrot.lane.b32.xlu0 %v2221, 8
        %v2239 = vpop.permute.xlu0 %2238
        %2240 = vrot.lane.b32.xlu0 %v2222, 8
        %v2241 = vpop.permute.xlu0 %2240
        %2242 = vrot.lane.b32.xlu0 %v2223, 8
        %v2243 = vpop.permute.xlu0 %2242
        %2244 = vrot.lane.b32.xlu0 %v2224, 8
        %v2245 = vpop.permute.xlu0 %2244
        %2246 = vrot.lane.b32.xlu0 %v2225, 8
        %v2247 = vpop.permute.xlu0 %2246
        %2248 = vrot.lane.b32.xlu0 %v2226, 8
        %v2249 = vpop.permute.xlu0 %2248
        %2250 = vrot.lane.b32.xlu0 %v2227, 8
        %v2251 = vpop.permute.xlu0 %2250
        %2252 = vrot.lane.b32.xlu0 %v2228, 8
        %v2253 = vpop.permute.xlu0 %2252
        %2254 = vrot.lane.b32.xlu0 %v2229, 8
        %v2255 = vpop.permute.xlu0 %2254
        %2256 = vrot.lane.b32.xlu0 %v2230, 8
        %v2257 = vpop.permute.xlu0 %2256
        %2258 = vrot.lane.b32.xlu0 %v2231, 8
        %v2259 = vpop.permute.xlu0 %2258
        %2260 = vrot.lane.b32.xlu0 %v2232, 8
        %v2261 = vpop.permute.xlu0 %2260
        %2262 = vrot.lane.b32.xlu0 %v2233, 8
        %v2263 = vpop.permute.xlu0 %2262
        %2264 = vrot.lane.b32.xlu0 %v2234, 8
        %v2265 = vpop.permute.xlu0 %2264
        %2266 = vrot.lane.b32.xlu0 %v2235, 8
        %v2267 = vpop.permute.xlu0 %2266
        %v2268 = vunpack.c.l.b16 %v868
        %v2269 = vunpack.c.l.b16 %v878
        %v2270 = vunpack.c.l.b16 %v892
        %v2271 = vunpack.c.l.b16 %v902
        %v2272 = vunpack.c.l.b16 %v916
        %v2273 = vunpack.c.l.b16 %v926
        %v2274 = vunpack.c.l.b16 %v940
        %v2275 = vunpack.c.l.b16 %v950
        %v2276 = vunpack.c.l.b16 %v964
        %v2277 = vunpack.c.l.b16 %v974
        %v2278 = vunpack.c.l.b16 %v988
        %v2279 = vunpack.c.l.b16 %v998
        %v2280 = vunpack.c.l.b16 %v1012
        %v2281 = vunpack.c.l.b16 %v1022
        %v2282 = vunpack.c.l.b16 %v1036
        %v2283 = vunpack.c.l.b16 %v1046
        %v2284 = vunpack.c.l.b16 %v1060
        %v2285 = vunpack.c.l.b16 %v1070
        %v2286 = vunpack.c.l.b16 %v1084
        %v2287 = vunpack.c.l.b16 %v1094
        %v2288 = vunpack.c.l.b16 %v1108
        %v2289 = vunpack.c.l.b16 %v1118
        %v2290 = vunpack.c.l.b16 %v1132
        %v2291 = vunpack.c.l.b16 %v1142
        %v2292 = vunpack.c.l.b16 %v1156
        %v2293 = vunpack.c.l.b16 %v1166
        %v2294 = vunpack.c.l.b16 %v1180
        %v2295 = vunpack.c.l.b16 %v1190
        %v2296 = vunpack.c.l.b16 %v1204
        %v2297 = vunpack.c.l.b16 %v1214
        %v2298 = vunpack.c.l.b16 %v1228
        %v2299 = vunpack.c.l.b16 %v1238
        %v2300 = vpack.c.b16 %v2269, %v2268
        %v2301 = vpack.c.b16 %v2271, %v2270
        %v2302 = vpack.c.b16 %v2273, %v2272
        %v2303 = vpack.c.b16 %v2275, %v2274
        %v2304 = vpack.c.b16 %v2277, %v2276
        %v2305 = vpack.c.b16 %v2279, %v2278
        %v2306 = vpack.c.b16 %v2281, %v2280
        %v2307 = vpack.c.b16 %v2283, %v2282
        %v2308 = vpack.c.b16 %v2285, %v2284
        %v2309 = vpack.c.b16 %v2287, %v2286
        %v2310 = vpack.c.b16 %v2289, %v2288
        %v2311 = vpack.c.b16 %v2291, %v2290
        %v2312 = vpack.c.b16 %v2293, %v2292
        %v2313 = vpack.c.b16 %v2295, %v2294
        %v2314 = vpack.c.b16 %v2297, %v2296
        %v2315 = vpack.c.b16 %v2299, %v2298
        %2316 = vrot.lane.b32.xlu0 %v2300, 12
        %v2317 = vpop.permute.xlu0 %2316
        %2318 = vrot.lane.b32.xlu0 %v2301, 12
        %v2319 = vpop.permute.xlu0 %2318
        %2320 = vrot.lane.b32.xlu0 %v2302, 12
        %v2321 = vpop.permute.xlu0 %2320
        %2322 = vrot.lane.b32.xlu0 %v2303, 12
        %v2323 = vpop.permute.xlu0 %2322
        %2324 = vrot.lane.b32.xlu0 %v2304, 12
        %v2325 = vpop.permute.xlu0 %2324
        %2326 = vrot.lane.b32.xlu0 %v2305, 12
        %v2327 = vpop.permute.xlu0 %2326
        %2328 = vrot.lane.b32.xlu0 %v2306, 12
        %v2329 = vpop.permute.xlu0 %2328
        %2330 = vrot.lane.b32.xlu0 %v2307, 12
        %v2331 = vpop.permute.xlu0 %2330
        %2332 = vrot.lane.b32.xlu0 %v2308, 12
        %v2333 = vpop.permute.xlu0 %2332
        %2334 = vrot.lane.b32.xlu0 %v2309, 12
        %v2335 = vpop.permute.xlu0 %2334
        %2336 = vrot.lane.b32.xlu0 %v2310, 12
        %v2337 = vpop.permute.xlu0 %2336
        %2338 = vrot.lane.b32.xlu0 %v2311, 12
        %v2339 = vpop.permute.xlu0 %2338
        %2340 = vrot.lane.b32.xlu0 %v2312, 12
        %v2341 = vpop.permute.xlu0 %2340
        %2342 = vrot.lane.b32.xlu0 %v2313, 12
        %v2343 = vpop.permute.xlu0 %2342
        %2344 = vrot.lane.b32.xlu0 %v2314, 12
        %v2345 = vpop.permute.xlu0 %2344
        %2346 = vrot.lane.b32.xlu0 %v2315, 12
        %v2347 = vpop.permute.xlu0 %2346
        %vm2348 = vcmask 31744
        %v2351 = vsel %vm2348, %v2076, %v2141
        %v2354 = vsel %vm2348, %v2077, %v2143
        %v2357 = vsel %vm2348, %v2078, %v2145
        %v2360 = vsel %vm2348, %v2079, %v2147
        %v2363 = vsel %vm2348, %v2080, %v2149
        %v2366 = vsel %vm2348, %v2081, %v2151
        %v2369 = vsel %vm2348, %v2082, %v2153
        %v2372 = vsel %vm2348, %v2083, %v2155
        %v2375 = vsel %vm2348, %v2084, %v2157
        %v2378 = vsel %vm2348, %v2085, %v2159
        %v2381 = vsel %vm2348, %v2086, %v2161
        %v2384 = vsel %vm2348, %v2087, %v2163
        %v2387 = vsel %vm2348, %v2088, %v2165
        %v2390 = vsel %vm2348, %v2089, %v2167
        %v2393 = vsel %vm2348, %v2090, %v2169
        %v2396 = vsel %vm2348, %v2091, %v2171
        %vm2397 = vcmask 64512
        %v2399 = vsel %vm2397, %v2351, %v2237
        %v2401 = vsel %vm2397, %v2354, %v2239
        %v2403 = vsel %vm2397, %v2357, %v2241
        %v2405 = vsel %vm2397, %v2360, %v2243
        %v2407 = vsel %vm2397, %v2363, %v2245
        %v2409 = vsel %vm2397, %v2366, %v2247
        %v2411 = vsel %vm2397, %v2369, %v2249
        %v2413 = vsel %vm2397, %v2372, %v2251
        %v2415 = vsel %vm2397, %v2375, %v2253
        %v2417 = vsel %vm2397, %v2378, %v2255
        %v2419 = vsel %vm2397, %v2381, %v2257
        %v2421 = vsel %vm2397, %v2384, %v2259
        %v2423 = vsel %vm2397, %v2387, %v2261
        %v2425 = vsel %vm2397, %v2390, %v2263
        %v2427 = vsel %vm2397, %v2393, %v2265
        %v2429 = vsel %vm2397, %v2396, %v2267
        %vm2430 = vcmask 97280
        %v2432 = vsel %vm2430, %v2399, %v2317
        %v2434 = vsel %vm2430, %v2401, %v2319
        %v2436 = vsel %vm2430, %v2403, %v2321
        %v2438 = vsel %vm2430, %v2405, %v2323
        %v2440 = vsel %vm2430, %v2407, %v2325
        %v2442 = vsel %vm2430, %v2409, %v2327
        %v2444 = vsel %vm2430, %v2411, %v2329
        %v2446 = vsel %vm2430, %v2413, %v2331
        %v2448 = vsel %vm2430, %v2415, %v2333
        %v2450 = vsel %vm2430, %v2417, %v2335
        %v2452 = vsel %vm2430, %v2419, %v2337
        %v2454 = vsel %vm2430, %v2421, %v2339
        %v2456 = vsel %vm2430, %v2423, %v2341
        %v2458 = vsel %vm2430, %v2425, %v2343
        %v2460 = vsel %vm2430, %v2427, %v2345
        %v2462 = vsel %vm2430, %v2429, %v2347
        %v2463 = vld [vmem:[%s1] sm:$0xf]
        %2465 = vset.pattern.permute.xlu0 0
        %2466 = vperm.xlu0 %2465, %v2027
        %v2467 = vpop.permute.xlu0 %2466
        %vm2469 = vcmask 130048
        %v2471 = vsel %vm2469, %v2463, 0
        %v2473 = vsel %vm2469, %v2432, 0
        %v2475 = vsel %vm2469, %v2434, 0
        %v2477 = vsel %vm2469, %v2436, 0
        %v2479 = vsel %vm2469, %v2438, 0
        %v2481 = vsel %vm2469, %v2440, 0
        %v2483 = vsel %vm2469, %v2442, 0
        %v2485 = vsel %vm2469, %v2444, 0
        %v2487 = vsel %vm2469, %v2446, 0
        %v2489 = vsel %vm2469, %v2448, 0
        %v2491 = vsel %vm2469, %v2450, 0
        %v2493 = vsel %vm2469, %v2452, 0
        %v2495 = vsel %vm2469, %v2454, 0
        %v2497 = vsel %vm2469, %v2456, 0
        %v2499 = vsel %vm2469, %v2458, 0
        %v2501 = vsel %vm2469, %v2460, 0
        %v2503 = vsel %vm2469, %v2462, 0
        %2505 = vmatprep.subr.bf16.mxu0 0
        %2506 = vmatpush1.bf16.xpose.msra.mxu0 %v2487
        %2507 = vmatprep.subr.bf16.mxu0 0
        %2508 = vmatpush1.bf16.xpose.msra.mxu0 %v2485
        %2509 = vmatprep.subr.bf16.mxu0 0
        %2510 = vmatpush1.bf16.xpose.msra.mxu0 %v2483
        %2511 = vmatprep.subr.bf16.mxu0 0
        %2512 = vmatpush1.bf16.xpose.msra.mxu0 %v2481
        %2513 = vmatprep.subr.bf16.mxu0 0
        %2514 = vmatpush1.bf16.xpose.msra.mxu0 %v2479
        %2515 = vmatprep.subr.bf16.mxu0 0
        %2516 = vmatpush1.bf16.xpose.msra.mxu0 %v2477
        %2517 = vmatprep.subr.bf16.mxu0 0
        %2518 = vmatpush1.bf16.xpose.msra.mxu0 %v2475
        %2519 = vmatprep.subr.bf16.mxu0 0
        %2520 = vmatpush1.bf16.xpose.msra.mxu0 %v2473
        %2521 = vmatprep.subr.bf16.mxu0 0
        %2522 = vmatpush2.bf16.xpose.msra.mxu0 %v2503
        %2523 = vmatprep.subr.bf16.mxu0 0
        %2524 = vmatpush2.bf16.xpose.msra.mxu0 %v2501
        %2525 = vmatprep.subr.bf16.mxu0 0
        %2526 = vmatpush2.bf16.xpose.msra.mxu0 %v2499
        %2527 = vmatprep.subr.bf16.mxu0 0
        %2528 = vmatpush2.bf16.xpose.msra.mxu0 %v2497
        %2529 = vmatprep.subr.bf16.mxu0 0
        %2530 = vmatpush2.bf16.xpose.msra.mxu0 %v2495
        %2531 = vmatprep.subr.bf16.mxu0 0
        %2532 = vmatpush2.bf16.xpose.msra.mxu0 %v2493
        %2533 = vmatprep.subr.bf16.mxu0 0
        %2534 = vmatpush2.bf16.xpose.msra.mxu0 %v2491
        %2535 = vmatprep.subr.bf16.mxu0 0
        %2536 = vmatpush2.bf16.xpose.msra.mxu0 %v2489
        %2537 = vmatprep.mubr.bf16.mxu0 0
        %2538 = vmatmul.mubr.bf16.gmra.mxu0 %v2471
        %v2539 = vpop.f32.mrf.mxu0
        %v2540 = vadd.f32 %v2467, %v2539
        %v2541 = vpop.f32.mrf.mxu0
        %v2542 = vadd.f32 %v2467, %v2541
        %v2543 = vpop.f32.mrf.mxu0
        %v2544 = vpop.f32.mrf.mxu0
        %2545 = vdwg.mxu0
        %vm2546 = vcmp.ge.f32.partialorder %v2540, 0.0
        %vm2547 = vcmp.ge.f32.partialorder %v2542, 0.0
        %v2548 = vmul.f32 %v2540, 0.01
        %v2549 = vmul.f32 %v2542, 0.01
        %v2550 = vsel %vm2546, %v2540, %v2548
        %v2551 = vsel %vm2547, %v2542, %v2549
        %2552 = vst [vmem:[%s177] sm:$0xff] %v2550
        %2553 = vst [vmem:[%s177 + $0x8] sm:$0xff] %v2551
        %v2554 = vunpack.c.l.b16 %v694
        %v2555 = vunpack.c.l.b16 %v697
        %v2556 = vunpack.c.l.b16 %v701
        %v2557 = vunpack.c.l.b16 %v704
        %v2558 = vunpack.c.l.b16 %v708
        %v2559 = vunpack.c.l.b16 %v711
        %v2560 = vunpack.c.l.b16 %v715
        %v2561 = vunpack.c.l.b16 %v718
        %v2562 = vunpack.c.l.b16 %v722
        %v2563 = vunpack.c.l.b16 %v725
        %v2564 = vunpack.c.l.b16 %v729
        %v2565 = vunpack.c.l.b16 %v732
        %v2566 = vunpack.c.l.b16 %v736
        %v2567 = vunpack.c.l.b16 %v739
        %v2568 = vunpack.c.l.b16 %v743
        %v2569 = vunpack.c.l.b16 %v746
        %v2570 = vunpack.c.l.b16 %v750
        %v2571 = vunpack.c.l.b16 %v753
        %v2572 = vunpack.c.l.b16 %v757
        %v2573 = vunpack.c.l.b16 %v760
        %v2574 = vunpack.c.l.b16 %v764
        %v2575 = vunpack.c.l.b16 %v767
        %v2576 = vunpack.c.l.b16 %v771
        %v2577 = vunpack.c.l.b16 %v774
        %v2578 = vunpack.c.l.b16 %v778
        %v2579 = vunpack.c.l.b16 %v781
        %v2580 = vunpack.c.l.b16 %v785
        %v2581 = vunpack.c.l.b16 %v788
        %v2582 = vunpack.c.l.b16 %v792
        %v2583 = vunpack.c.l.b16 %v795
        %v2584 = vunpack.c.l.b16 %v799
        %v2585 = vunpack.c.l.b16 %v802
        %v2586 = vpack.c.b16 %v2555, %v2554
        %v2587 = vpack.c.b16 %v2557, %v2556
        %v2588 = vpack.c.b16 %v2559, %v2558
        %v2589 = vpack.c.b16 %v2561, %v2560
        %v2590 = vpack.c.b16 %v2563, %v2562
        %v2591 = vpack.c.b16 %v2565, %v2564
        %v2592 = vpack.c.b16 %v2567, %v2566
        %v2593 = vpack.c.b16 %v2569, %v2568
        %v2594 = vpack.c.b16 %v2571, %v2570
        %v2595 = vpack.c.b16 %v2573, %v2572
        %v2596 = vpack.c.b16 %v2575, %v2574
        %v2597 = vpack.c.b16 %v2577, %v2576
        %v2598 = vpack.c.b16 %v2579, %v2578
        %v2599 = vpack.c.b16 %v2581, %v2580
        %v2600 = vpack.c.b16 %v2583, %v2582
        %v2601 = vpack.c.b16 %v2585, %v2584
        %2602 = vrot.lane.b32.xlu0 %v2586, 4
        %v2603 = vpop.permute.xlu0 %2602
        %2604 = vrot.lane.b32.xlu0 %v2587, 4
        %v2605 = vpop.permute.xlu0 %2604
        %2606 = vrot.lane.b32.xlu0 %v2588, 4
        %v2607 = vpop.permute.xlu0 %2606
        %2608 = vrot.lane.b32.xlu0 %v2589, 4
        %v2609 = vpop.permute.xlu0 %2608
        %2610 = vrot.lane.b32.xlu0 %v2590, 4
        %v2611 = vpop.permute.xlu0 %2610
        %2612 = vrot.lane.b32.xlu0 %v2591, 4
        %v2613 = vpop.permute.xlu0 %2612
        %2614 = vrot.lane.b32.xlu0 %v2592, 4
        %v2615 = vpop.permute.xlu0 %2614
        %2616 = vrot.lane.b32.xlu0 %v2593, 4
        %v2617 = vpop.permute.xlu0 %2616
        %2618 = vrot.lane.b32.xlu0 %v2594, 4
        %v2619 = vpop.permute.xlu0 %2618
        %2620 = vrot.lane.b32.xlu0 %v2595, 4
        %v2621 = vpop.permute.xlu0 %2620
        %2622 = vrot.lane.b32.xlu0 %v2596, 4
        %v2623 = vpop.permute.xlu0 %2622
        %2624 = vrot.lane.b32.xlu0 %v2597, 4
        %v2625 = vpop.permute.xlu0 %2624
        %2626 = vrot.lane.b32.xlu0 %v2598, 4
        %v2627 = vpop.permute.xlu0 %2626
        %2628 = vrot.lane.b32.xlu0 %v2599, 4
        %v2629 = vpop.permute.xlu0 %2628
        %2630 = vrot.lane.b32.xlu0 %v2600, 4
        %v2631 = vpop.permute.xlu0 %2630
        %2632 = vrot.lane.b32.xlu0 %v2601, 4
        %v2633 = vpop.permute.xlu0 %2632
        %2634 = vrot.lane.b32.xlu0 %v2300, 8
        %v2635 = vpop.permute.xlu0 %2634
        %2636 = vrot.lane.b32.xlu0 %v2301, 8
        %v2637 = vpop.permute.xlu0 %2636
        %2638 = vrot.lane.b32.xlu0 %v2302, 8
        %v2639 = vpop.permute.xlu0 %2638
        %2640 = vrot.lane.b32.xlu0 %v2303, 8
        %v2641 = vpop.permute.xlu0 %2640
        %2642 = vrot.lane.b32.xlu0 %v2304, 8
        %v2643 = vpop.permute.xlu0 %2642
        %2644 = vrot.lane.b32.xlu0 %v2305, 8
        %v2645 = vpop.permute.xlu0 %2644
        %2646 = vrot.lane.b32.xlu0 %v2306, 8
        %v2647 = vpop.permute.xlu0 %2646
        %2648 = vrot.lane.b32.xlu0 %v2307, 8
        %v2649 = vpop.permute.xlu0 %2648
        %2650 = vrot.lane.b32.xlu0 %v2308, 8
        %v2651 = vpop.permute.xlu0 %2650
        %2652 = vrot.lane.b32.xlu0 %v2309, 8
        %v2653 = vpop.permute.xlu0 %2652
        %2654 = vrot.lane.b32.xlu0 %v2310, 8
        %v2655 = vpop.permute.xlu0 %2654
        %2656 = vrot.lane.b32.xlu0 %v2311, 8
        %v2657 = vpop.permute.xlu0 %2656
        %2658 = vrot.lane.b32.xlu0 %v2312, 8
        %v2659 = vpop.permute.xlu0 %2658
        %2660 = vrot.lane.b32.xlu0 %v2313, 8
        %v2661 = vpop.permute.xlu0 %2660
        %2662 = vrot.lane.b32.xlu0 %v2314, 8
        %v2663 = vpop.permute.xlu0 %2662
        %2664 = vrot.lane.b32.xlu0 %v2315, 8
        %v2665 = vpop.permute.xlu0 %2664
        %v2666 = vunpack.c.l.b16 %v1306
        %v2667 = vunpack.c.l.b16 %v1309
        %v2668 = vunpack.c.l.b16 %v1313
        %v2669 = vunpack.c.l.b16 %v1316
        %v2670 = vunpack.c.l.b16 %v1320
        %v2671 = vunpack.c.l.b16 %v1323
        %v2672 = vunpack.c.l.b16 %v1327
        %v2673 = vunpack.c.l.b16 %v1330
        %v2674 = vunpack.c.l.b16 %v1334
        %v2675 = vunpack.c.l.b16 %v1337
        %v2676 = vunpack.c.l.b16 %v1341
        %v2677 = vunpack.c.l.b16 %v1344
        %v2678 = vunpack.c.l.b16 %v1348
        %v2679 = vunpack.c.l.b16 %v1351
        %v2680 = vunpack.c.l.b16 %v1355
        %v2681 = vunpack.c.l.b16 %v1358
        %v2682 = vunpack.c.l.b16 %v1362
        %v2683 = vunpack.c.l.b16 %v1365
        %v2684 = vunpack.c.l.b16 %v1369
        %v2685 = vunpack.c.l.b16 %v1372
        %v2686 = vunpack.c.l.b16 %v1376
        %v2687 = vunpack.c.l.b16 %v1379
        %v2688 = vunpack.c.l.b16 %v1383
        %v2689 = vunpack.c.l.b16 %v1386
        %v2690 = vunpack.c.l.b16 %v1390
        %v2691 = vunpack.c.l.b16 %v1393
        %v2692 = vunpack.c.l.b16 %v1397
        %v2693 = vunpack.c.l.b16 %v1400
        %v2694 = vunpack.c.l.b16 %v1404
        %v2695 = vunpack.c.l.b16 %v1407
        %v2696 = vunpack.c.l.b16 %v1411
        %v2697 = vunpack.c.l.b16 %v1414
        %v2698 = vpack.c.b16 %v2667, %v2666
        %v2699 = vpack.c.b16 %v2669, %v2668
        %v2700 = vpack.c.b16 %v2671, %v2670
        %v2701 = vpack.c.b16 %v2673, %v2672
        %v2702 = vpack.c.b16 %v2675, %v2674
        %v2703 = vpack.c.b16 %v2677, %v2676
        %v2704 = vpack.c.b16 %v2679, %v2678
        %v2705 = vpack.c.b16 %v2681, %v2680
        %v2706 = vpack.c.b16 %v2683, %v2682
        %v2707 = vpack.c.b16 %v2685, %v2684
        %v2708 = vpack.c.b16 %v2687, %v2686
        %v2709 = vpack.c.b16 %v2689, %v2688
        %v2710 = vpack.c.b16 %v2691, %v2690
        %v2711 = vpack.c.b16 %v2693, %v2692
        %v2712 = vpack.c.b16 %v2695, %v2694
        %v2713 = vpack.c.b16 %v2697, %v2696
        %2714 = vrot.lane.b32.xlu0 %v2698, 12
        %v2715 = vpop.permute.xlu0 %2714
        %2716 = vrot.lane.b32.xlu0 %v2699, 12
        %v2717 = vpop.permute.xlu0 %2716
        %2718 = vrot.lane.b32.xlu0 %v2700, 12
        %v2719 = vpop.permute.xlu0 %2718
        %2720 = vrot.lane.b32.xlu0 %v2701, 12
        %v2721 = vpop.permute.xlu0 %2720
        %2722 = vrot.lane.b32.xlu0 %v2702, 12
        %v2723 = vpop.permute.xlu0 %2722
        %2724 = vrot.lane.b32.xlu0 %v2703, 12
        %v2725 = vpop.permute.xlu0 %2724
        %2726 = vrot.lane.b32.xlu0 %v2704, 12
        %v2727 = vpop.permute.xlu0 %2726
        %2728 = vrot.lane.b32.xlu0 %v2705, 12
        %v2729 = vpop.permute.xlu0 %2728
        %2730 = vrot.lane.b32.xlu0 %v2706, 12
        %v2731 = vpop.permute.xlu0 %2730
        %2732 = vrot.lane.b32.xlu0 %v2707, 12
        %v2733 = vpop.permute.xlu0 %2732
        %2734 = vrot.lane.b32.xlu0 %v2708, 12
        %v2735 = vpop.permute.xlu0 %2734
        %2736 = vrot.lane.b32.xlu0 %v2709, 12
        %v2737 = vpop.permute.xlu0 %2736
        %2738 = vrot.lane.b32.xlu0 %v2710, 12
        %v2739 = vpop.permute.xlu0 %2738
        %2740 = vrot.lane.b32.xlu0 %v2711, 12
        %v2741 = vpop.permute.xlu0 %2740
        %2742 = vrot.lane.b32.xlu0 %v2712, 12
        %v2743 = vpop.permute.xlu0 %2742
        %2744 = vrot.lane.b32.xlu0 %v2713, 12
        %v2745 = vpop.permute.xlu0 %2744
        %v2748 = vsel %vm2348, %v2124, %v2603
        %v2751 = vsel %vm2348, %v2125, %v2605
        %v2754 = vsel %vm2348, %v2126, %v2607
        %v2757 = vsel %vm2348, %v2127, %v2609
        %v2760 = vsel %vm2348, %v2128, %v2611
        %v2763 = vsel %vm2348, %v2129, %v2613
        %v2766 = vsel %vm2348, %v2130, %v2615
        %v2769 = vsel %vm2348, %v2131, %v2617
        %v2772 = vsel %vm2348, %v2132, %v2619
        %v2775 = vsel %vm2348, %v2133, %v2621
        %v2778 = vsel %vm2348, %v2134, %v2623
        %v2781 = vsel %vm2348, %v2135, %v2625
        %v2784 = vsel %vm2348, %v2136, %v2627
        %v2787 = vsel %vm2348, %v2137, %v2629
        %v2790 = vsel %vm2348, %v2138, %v2631
        %v2793 = vsel %vm2348, %v2139, %v2633
        %v2795 = vsel %vm2397, %v2748, %v2635
        %v2797 = vsel %vm2397, %v2751, %v2637
        %v2799 = vsel %vm2397, %v2754, %v2639
        %v2801 = vsel %vm2397, %v2757, %v2641
        %v2803 = vsel %vm2397, %v2760, %v2643
        %v2805 = vsel %vm2397, %v2763, %v2645
        %v2807 = vsel %vm2397, %v2766, %v2647
        %v2809 = vsel %vm2397, %v2769, %v2649
        %v2811 = vsel %vm2397, %v2772, %v2651
        %v2813 = vsel %vm2397, %v2775, %v2653
        %v2815 = vsel %vm2397, %v2778, %v2655
        %v2817 = vsel %vm2397, %v2781, %v2657
        %v2819 = vsel %vm2397, %v2784, %v2659
        %v2821 = vsel %vm2397, %v2787, %v2661
        %v2823 = vsel %vm2397, %v2790, %v2663
        %v2825 = vsel %vm2397, %v2793, %v2665
        %v2827 = vsel %vm2430, %v2795, %v2715
        %v2829 = vsel %vm2430, %v2797, %v2717
        %v2831 = vsel %vm2430, %v2799, %v2719
        %v2833 = vsel %vm2430, %v2801, %v2721
        %v2835 = vsel %vm2430, %v2803, %v2723
        %v2837 = vsel %vm2430, %v2805, %v2725
        %v2839 = vsel %vm2430, %v2807, %v2727
        %v2841 = vsel %vm2430, %v2809, %v2729
        %v2843 = vsel %vm2430, %v2811, %v2731
        %v2845 = vsel %vm2430, %v2813, %v2733
        %v2847 = vsel %vm2430, %v2815, %v2735
        %v2849 = vsel %vm2430, %v2817, %v2737
        %v2851 = vsel %vm2430, %v2819, %v2739
        %v2853 = vsel %vm2430, %v2821, %v2741
        %v2855 = vsel %vm2430, %v2823, %v2743
        %v2857 = vsel %vm2430, %v2825, %v2745
        %s2858 = scalar_lea.vmem %s1, 4
        %v2859 = vld [vmem:[%s2858] sm:$0xf]
        %v2861 = vsel %vm2469, %v2859, 0
        %v2863 = vsel %vm2469, %v2827, 0
        %v2865 = vsel %vm2469, %v2829, 0
        %v2867 = vsel %vm2469, %v2831, 0
        %v2869 = vsel %vm2469, %v2833, 0
        %v2871 = vsel %vm2469, %v2835, 0
        %v2873 = vsel %vm2469, %v2837, 0
        %v2875 = vsel %vm2469, %v2839, 0
        %v2877 = vsel %vm2469, %v2841, 0
        %v2879 = vsel %vm2469, %v2843, 0
        %v2881 = vsel %vm2469, %v2845, 0
        %v2883 = vsel %vm2469, %v2847, 0
        %v2885 = vsel %vm2469, %v2849, 0
        %v2887 = vsel %vm2469, %v2851, 0
        %v2889 = vsel %vm2469, %v2853, 0
        %v2891 = vsel %vm2469, %v2855, 0
        %v2893 = vsel %vm2469, %v2857, 0
        %2895 = vmatprep.subr.bf16.mxu0 0
        %2896 = vmatpush1.bf16.xpose.msra.mxu0 %v2877
        %2897 = vmatprep.subr.bf16.mxu0 0
        %2898 = vmatpush1.bf16.xpose.msra.mxu0 %v2875
        %2899 = vmatprep.subr.bf16.mxu0 0
        %2900 = vmatpush1.bf16.xpose.msra.mxu0 %v2873
        %2901 = vmatprep.subr.bf16.mxu0 0
        %2902 = vmatpush1.bf16.xpose.msra.mxu0 %v2871
        %2903 = vmatprep.subr.bf16.mxu0 0
        %2904 = vmatpush1.bf16.xpose.msra.mxu0 %v2869
        %2905 = vmatprep.subr.bf16.mxu0 0
        %2906 = vmatpush1.bf16.xpose.msra.mxu0 %v2867
        %2907 = vmatprep.subr.bf16.mxu0 0
        %2908 = vmatpush1.bf16.xpose.msra.mxu0 %v2865
        %2909 = vmatprep.subr.bf16.mxu0 0
        %2910 = vmatpush1.bf16.xpose.msra.mxu0 %v2863
        %2911 = vmatprep.subr.bf16.mxu0 0
        %2912 = vmatpush2.bf16.xpose.msra.mxu0 %v2893
        %2913 = vmatprep.subr.bf16.mxu0 0
        %2914 = vmatpush2.bf16.xpose.msra.mxu0 %v2891
        %2915 = vmatprep.subr.bf16.mxu0 0
        %2916 = vmatpush2.bf16.xpose.msra.mxu0 %v2889
        %2917 = vmatprep.subr.bf16.mxu0 0
        %2918 = vmatpush2.bf16.xpose.msra.mxu0 %v2887
        %2919 = vmatprep.subr.bf16.mxu0 0
        %2920 = vmatpush2.bf16.xpose.msra.mxu0 %v2885
        %2921 = vmatprep.subr.bf16.mxu0 0
        %2922 = vmatpush2.bf16.xpose.msra.mxu0 %v2883
        %2923 = vmatprep.subr.bf16.mxu0 0
        %2924 = vmatpush2.bf16.xpose.msra.mxu0 %v2881
        %2925 = vmatprep.subr.bf16.mxu0 0
        %2926 = vmatpush2.bf16.xpose.msra.mxu0 %v2879
        %2927 = vmatprep.mubr.bf16.mxu0 0
        %2928 = vmatmul.mubr.bf16.gmra.mxu0 %v2861
        %v2929 = vpop.f32.mrf.mxu0
        %v2930 = vadd.f32 %v2467, %v2929
        %v2931 = vpop.f32.mrf.mxu0
        %v2932 = vadd.f32 %v2467, %v2931
        %v2933 = vpop.f32.mrf.mxu0
        %v2934 = vpop.f32.mrf.mxu0
        %2935 = vdwg.mxu0
        %vm2936 = vcmp.ge.f32.partialorder %v2930, 0.0
        %vm2937 = vcmp.ge.f32.partialorder %v2932, 0.0
        %v2938 = vmul.f32 %v2930, 0.01
        %v2939 = vmul.f32 %v2932, 0.01
        %v2940 = vsel %vm2936, %v2930, %v2938
        %v2941 = vsel %vm2937, %v2932, %v2939
        %s2942 = scalar_lea.vmem %s177, 16 [#allocation2]
        %2943 = vst [vmem:[%s2942] sm:$0xff] %v2940
        %2944 = vst [vmem:[%s2942 + $0x8] sm:$0xff] %v2941
        %2945 = vrot.lane.b32.xlu0 %v2300, 4
        %v2946 = vpop.permute.xlu0 %2945
        %2947 = vrot.lane.b32.xlu0 %v2301, 4
        %v2948 = vpop.permute.xlu0 %2947
        %2949 = vrot.lane.b32.xlu0 %v2302, 4
        %v2950 = vpop.permute.xlu0 %2949
        %2951 = vrot.lane.b32.xlu0 %v2303, 4
        %v2952 = vpop.permute.xlu0 %2951
        %2953 = vrot.lane.b32.xlu0 %v2304, 4
        %v2954 = vpop.permute.xlu0 %2953
        %2955 = vrot.lane.b32.xlu0 %v2305, 4
        %v2956 = vpop.permute.xlu0 %2955
        %2957 = vrot.lane.b32.xlu0 %v2306, 4
        %v2958 = vpop.permute.xlu0 %2957
        %2959 = vrot.lane.b32.xlu0 %v2307, 4
        %v2960 = vpop.permute.xlu0 %2959
        %2961 = vrot.lane.b32.xlu0 %v2308, 4
        %v2962 = vpop.permute.xlu0 %2961
        %2963 = vrot.lane.b32.xlu0 %v2309, 4
        %v2964 = vpop.permute.xlu0 %2963
        %2965 = vrot.lane.b32.xlu0 %v2310, 4
        %v2966 = vpop.permute.xlu0 %2965
        %2967 = vrot.lane.b32.xlu0 %v2311, 4
        %v2968 = vpop.permute.xlu0 %2967
        %2969 = vrot.lane.b32.xlu0 %v2312, 4
        %v2970 = vpop.permute.xlu0 %2969
        %2971 = vrot.lane.b32.xlu0 %v2313, 4
        %v2972 = vpop.permute.xlu0 %2971
        %2973 = vrot.lane.b32.xlu0 %v2314, 4
        %v2974 = vpop.permute.xlu0 %2973
        %2975 = vrot.lane.b32.xlu0 %v2315, 4
        %v2976 = vpop.permute.xlu0 %2975
        %v2993 = vunpack.c.l.b16 %v1419
        %v2994 = vunpack.c.l.b16 %v1420
        %v2995 = vunpack.c.l.b16 %v1421
        %v2996 = vunpack.c.l.b16 %v1422
        %v2997 = vunpack.c.l.b16 %v1423
        %v2998 = vunpack.c.l.b16 %v1424
        %v2999 = vunpack.c.l.b16 %v1425
        %v3000 = vunpack.c.l.b16 %v1426
        %v3001 = vunpack.c.l.b16 %v1427
        %v3002 = vunpack.c.l.b16 %v1428
        %v3003 = vunpack.c.l.b16 %v1429
        %v3004 = vunpack.c.l.b16 %v1430
        %v3005 = vunpack.c.l.b16 %v1431
        %v3006 = vunpack.c.l.b16 %v1432
        %v3007 = vunpack.c.l.b16 %v1433
        %v3008 = vunpack.c.l.b16 %v1434
        %v3009 = vunpack.c.l.b16 %v1435
        %v3010 = vunpack.c.l.b16 %v1436
        %v3011 = vunpack.c.l.b16 %v1437
        %v3012 = vunpack.c.l.b16 %v1438
        %v3013 = vunpack.c.l.b16 %v1439
        %v3014 = vunpack.c.l.b16 %v1440
        %v3015 = vunpack.c.l.b16 %v1441
        %v3016 = vunpack.c.l.b16 %v1442
        %v3017 = vunpack.c.l.b16 %v1443
        %v3018 = vunpack.c.l.b16 %v1444
        %v3019 = vunpack.c.l.b16 %v1445
        %v3020 = vunpack.c.l.b16 %v1446
        %v3021 = vunpack.c.l.b16 %v1447
        %v3022 = vunpack.c.l.b16 %v1448
        %v3023 = vunpack.c.l.b16 %v1449
        %v3024 = vunpack.c.l.b16 %v1450
        %v3025 = vpack.c.b16 %v2994, %v2993
        %v3026 = vpack.c.b16 %v2996, %v2995
        %v3027 = vpack.c.b16 %v2998, %v2997
        %v3028 = vpack.c.b16 %v3000, %v2999
        %v3029 = vpack.c.b16 %v3002, %v3001
        %v3030 = vpack.c.b16 %v3004, %v3003
        %v3031 = vpack.c.b16 %v3006, %v3005
        %v3032 = vpack.c.b16 %v3008, %v3007
        %v3033 = vpack.c.b16 %v3010, %v3009
        %v3034 = vpack.c.b16 %v3012, %v3011
        %v3035 = vpack.c.b16 %v3014, %v3013
        %v3036 = vpack.c.b16 %v3016, %v3015
        %v3037 = vpack.c.b16 %v3018, %v3017
        %v3038 = vpack.c.b16 %v3020, %v3019
        %v3039 = vpack.c.b16 %v3022, %v3021
        %v3040 = vpack.c.b16 %v3024, %v3023
        %3041 = vrot.lane.b32.xlu0 %v3025, 8
        %v3042 = vpop.permute.xlu0 %3041
        %3043 = vrot.lane.b32.xlu0 %v3026, 8
        %v3044 = vpop.permute.xlu0 %3043
        %3045 = vrot.lane.b32.xlu0 %v3027, 8
        %v3046 = vpop.permute.xlu0 %3045
        %3047 = vrot.lane.b32.xlu0 %v3028, 8
        %v3048 = vpop.permute.xlu0 %3047
        %3049 = vrot.lane.b32.xlu0 %v3029, 8
        %v3050 = vpop.permute.xlu0 %3049
        %3051 = vrot.lane.b32.xlu0 %v3030, 8
        %v3052 = vpop.permute.xlu0 %3051
        %3053 = vrot.lane.b32.xlu0 %v3031, 8
        %v3054 = vpop.permute.xlu0 %3053
        %3055 = vrot.lane.b32.xlu0 %v3032, 8
        %v3056 = vpop.permute.xlu0 %3055
        %3057 = vrot.lane.b32.xlu0 %v3033, 8
        %v3058 = vpop.permute.xlu0 %3057
        %3059 = vrot.lane.b32.xlu0 %v3034, 8
        %v3060 = vpop.permute.xlu0 %3059
        %3061 = vrot.lane.b32.xlu0 %v3035, 8
        %v3062 = vpop.permute.xlu0 %3061
        %3063 = vrot.lane.b32.xlu0 %v3036, 8
        %v3064 = vpop.permute.xlu0 %3063
        %3065 = vrot.lane.b32.xlu0 %v3037, 8
        %v3066 = vpop.permute.xlu0 %3065
        %3067 = vrot.lane.b32.xlu0 %v3038, 8
        %v3068 = vpop.permute.xlu0 %3067
        %3069 = vrot.lane.b32.xlu0 %v3039, 8
        %v3070 = vpop.permute.xlu0 %3069
        %3071 = vrot.lane.b32.xlu0 %v3040, 8
        %v3072 = vpop.permute.xlu0 %3071
        %v3073 = vunpack.c.l.b16 %v1480
        %v3074 = vunpack.c.l.b16 %v1490
        %v3075 = vunpack.c.l.b16 %v1504
        %v3076 = vunpack.c.l.b16 %v1514
        %v3077 = vunpack.c.l.b16 %v1528
        %v3078 = vunpack.c.l.b16 %v1538
        %v3079 = vunpack.c.l.b16 %v1552
        %v3080 = vunpack.c.l.b16 %v1562
        %v3081 = vunpack.c.l.b16 %v1576
        %v3082 = vunpack.c.l.b16 %v1586
        %v3083 = vunpack.c.l.b16 %v1600
        %v3084 = vunpack.c.l.b16 %v1610
        %v3085 = vunpack.c.l.b16 %v1624
        %v3086 = vunpack.c.l.b16 %v1634
        %v3087 = vunpack.c.l.b16 %v1648
        %v3088 = vunpack.c.l.b16 %v1658
        %v3089 = vunpack.c.l.b16 %v1672
        %v3090 = vunpack.c.l.b16 %v1682
        %v3091 = vunpack.c.l.b16 %v1696
        %v3092 = vunpack.c.l.b16 %v1706
        %v3093 = vunpack.c.l.b16 %v1720
        %v3094 = vunpack.c.l.b16 %v1730
        %v3095 = vunpack.c.l.b16 %v1744
        %v3096 = vunpack.c.l.b16 %v1754
        %v3097 = vunpack.c.l.b16 %v1768
        %v3098 = vunpack.c.l.b16 %v1778
        %v3099 = vunpack.c.l.b16 %v1792
        %v3100 = vunpack.c.l.b16 %v1802
        %v3101 = vunpack.c.l.b16 %v1816
        %v3102 = vunpack.c.l.b16 %v1826
        %v3103 = vunpack.c.l.b16 %v1840
        %v3104 = vunpack.c.l.b16 %v1850
        %v3105 = vpack.c.b16 %v3074, %v3073
        %v3106 = vpack.c.b16 %v3076, %v3075
        %v3107 = vpack.c.b16 %v3078, %v3077
        %v3108 = vpack.c.b16 %v3080, %v3079
        %v3109 = vpack.c.b16 %v3082, %v3081
        %v3110 = vpack.c.b16 %v3084, %v3083
        %v3111 = vpack.c.b16 %v3086, %v3085
        %v3112 = vpack.c.b16 %v3088, %v3087
        %v3113 = vpack.c.b16 %v3090, %v3089
        %v3114 = vpack.c.b16 %v3092, %v3091
        %v3115 = vpack.c.b16 %v3094, %v3093
        %v3116 = vpack.c.b16 %v3096, %v3095
        %v3117 = vpack.c.b16 %v3098, %v3097
        %v3118 = vpack.c.b16 %v3100, %v3099
        %v3119 = vpack.c.b16 %v3102, %v3101
        %v3120 = vpack.c.b16 %v3104, %v3103
        %3121 = vrot.lane.b32.xlu0 %v3105, 12
        %v3122 = vpop.permute.xlu0 %3121
        %3123 = vrot.lane.b32.xlu0 %v3106, 12
        %v3124 = vpop.permute.xlu0 %3123
        %3125 = vrot.lane.b32.xlu0 %v3107, 12
        %v3126 = vpop.permute.xlu0 %3125
        %3127 = vrot.lane.b32.xlu0 %v3108, 12
        %v3128 = vpop.permute.xlu0 %3127
        %3129 = vrot.lane.b32.xlu0 %v3109, 12
        %v3130 = vpop.permute.xlu0 %3129
        %3131 = vrot.lane.b32.xlu0 %v3110, 12
        %v3132 = vpop.permute.xlu0 %3131
        %3133 = vrot.lane.b32.xlu0 %v3111, 12
        %v3134 = vpop.permute.xlu0 %3133
        %3135 = vrot.lane.b32.xlu0 %v3112, 12
        %v3136 = vpop.permute.xlu0 %3135
        %3137 = vrot.lane.b32.xlu0 %v3113, 12
        %v3138 = vpop.permute.xlu0 %3137
        %3139 = vrot.lane.b32.xlu0 %v3114, 12
        %v3140 = vpop.permute.xlu0 %3139
        %3141 = vrot.lane.b32.xlu0 %v3115, 12
        %v3142 = vpop.permute.xlu0 %3141
        %3143 = vrot.lane.b32.xlu0 %v3116, 12
        %v3144 = vpop.permute.xlu0 %3143
        %3145 = vrot.lane.b32.xlu0 %v3117, 12
        %v3146 = vpop.permute.xlu0 %3145
        %3147 = vrot.lane.b32.xlu0 %v3118, 12
        %v3148 = vpop.permute.xlu0 %3147
        %3149 = vrot.lane.b32.xlu0 %v3119, 12
        %v3150 = vpop.permute.xlu0 %3149
        %3151 = vrot.lane.b32.xlu0 %v3120, 12
        %v3152 = vpop.permute.xlu0 %3151
        %v3155 = vsel %vm2348, %v2220, %v2946
        %v3158 = vsel %vm2348, %v2221, %v2948
        %v3161 = vsel %vm2348, %v2222, %v2950
        %v3164 = vsel %vm2348, %v2223, %v2952
        %v3167 = vsel %vm2348, %v2224, %v2954
        %v3170 = vsel %vm2348, %v2225, %v2956
        %v3173 = vsel %vm2348, %v2226, %v2958
        %v3176 = vsel %vm2348, %v2227, %v2960
        %v3179 = vsel %vm2348, %v2228, %v2962
        %v3182 = vsel %vm2348, %v2229, %v2964
        %v3185 = vsel %vm2348, %v2230, %v2966
        %v3188 = vsel %vm2348, %v2231, %v2968
        %v3191 = vsel %vm2348, %v2232, %v2970
        %v3194 = vsel %vm2348, %v2233, %v2972
        %v3197 = vsel %vm2348, %v2234, %v2974
        %v3200 = vsel %vm2348, %v2235, %v2976
        %v3202 = vsel %vm2397, %v3155, %v3042
        %v3204 = vsel %vm2397, %v3158, %v3044
        %v3206 = vsel %vm2397, %v3161, %v3046
        %v3208 = vsel %vm2397, %v3164, %v3048
        %v3210 = vsel %vm2397, %v3167, %v3050
        %v3212 = vsel %vm2397, %v3170, %v3052
        %v3214 = vsel %vm2397, %v3173, %v3054
        %v3216 = vsel %vm2397, %v3176, %v3056
        %v3218 = vsel %vm2397, %v3179, %v3058
        %v3220 = vsel %vm2397, %v3182, %v3060
        %v3222 = vsel %vm2397, %v3185, %v3062
        %v3224 = vsel %vm2397, %v3188, %v3064
        %v3226 = vsel %vm2397, %v3191, %v3066
        %v3228 = vsel %vm2397, %v3194, %v3068
        %v3230 = vsel %vm2397, %v3197, %v3070
        %v3232 = vsel %vm2397, %v3200, %v3072
        %v3234 = vsel %vm2430, %v3202, %v3122
        %v3236 = vsel %vm2430, %v3204, %v3124
        %v3238 = vsel %vm2430, %v3206, %v3126
        %v3240 = vsel %vm2430, %v3208, %v3128
        %v3242 = vsel %vm2430, %v3210, %v3130
        %v3244 = vsel %vm2430, %v3212, %v3132
        %v3246 = vsel %vm2430, %v3214, %v3134
        %v3248 = vsel %vm2430, %v3216, %v3136
        %v3250 = vsel %vm2430, %v3218, %v3138
        %v3252 = vsel %vm2430, %v3220, %v3140
        %v3254 = vsel %vm2430, %v3222, %v3142
        %v3256 = vsel %vm2430, %v3224, %v3144
        %v3258 = vsel %vm2430, %v3226, %v3146
        %v3260 = vsel %vm2430, %v3228, %v3148
        %v3262 = vsel %vm2430, %v3230, %v3150
        %v3264 = vsel %vm2430, %v3232, %v3152
        %s3265 = scalar_lea.vmem %s1, 8
        %v3266 = vld [vmem:[%s3265] sm:$0xf]
        %v3268 = vsel %vm2469, %v3266, 0
        %v3270 = vsel %vm2469, %v3234, 0
        %v3272 = vsel %vm2469, %v3236, 0
        %v3274 = vsel %vm2469, %v3238, 0
        %v3276 = vsel %vm2469, %v3240, 0
        %v3278 = vsel %vm2469, %v3242, 0
        %v3280 = vsel %vm2469, %v3244, 0
        %v3282 = vsel %vm2469, %v3246, 0
        %v3284 = vsel %vm2469, %v3248, 0
        %v3286 = vsel %vm2469, %v3250, 0
        %v3288 = vsel %vm2469, %v3252, 0
        %v3290 = vsel %vm2469, %v3254, 0
        %v3292 = vsel %vm2469, %v3256, 0
        %v3294 = vsel %vm2469, %v3258, 0
        %v3296 = vsel %vm2469, %v3260, 0
        %v3298 = vsel %vm2469, %v3262, 0
        %v3300 = vsel %vm2469, %v3264, 0
        %3302 = vmatprep.subr.bf16.mxu0 0
        %3303 = vmatpush1.bf16.xpose.msra.mxu0 %v3284
        %3304 = vmatprep.subr.bf16.mxu0 0
        %3305 = vmatpush1.bf16.xpose.msra.mxu0 %v3282
        %3306 = vmatprep.subr.bf16.mxu0 0
        %3307 = vmatpush1.bf16.xpose.msra.mxu0 %v3280
        %3308 = vmatprep.subr.bf16.mxu0 0
        %3309 = vmatpush1.bf16.xpose.msra.mxu0 %v3278
        %3310 = vmatprep.subr.bf16.mxu0 0
        %3311 = vmatpush1.bf16.xpose.msra.mxu0 %v3276
        %3312 = vmatprep.subr.bf16.mxu0 0
        %3313 = vmatpush1.bf16.xpose.msra.mxu0 %v3274
        %3314 = vmatprep.subr.bf16.mxu0 0
        %3315 = vmatpush1.bf16.xpose.msra.mxu0 %v3272
        %3316 = vmatprep.subr.bf16.mxu0 0
        %3317 = vmatpush1.bf16.xpose.msra.mxu0 %v3270
        %3318 = vmatprep.subr.bf16.mxu0 0
        %3319 = vmatpush2.bf16.xpose.msra.mxu0 %v3300
        %3320 = vmatprep.subr.bf16.mxu0 0
        %3321 = vmatpush2.bf16.xpose.msra.mxu0 %v3298
        %3322 = vmatprep.subr.bf16.mxu0 0
        %3323 = vmatpush2.bf16.xpose.msra.mxu0 %v3296
        %3324 = vmatprep.subr.bf16.mxu0 0
        %3325 = vmatpush2.bf16.xpose.msra.mxu0 %v3294
        %3326 = vmatprep.subr.bf16.mxu0 0
        %3327 = vmatpush2.bf16.xpose.msra.mxu0 %v3292
        %3328 = vmatprep.subr.bf16.mxu0 0
        %3329 = vmatpush2.bf16.xpose.msra.mxu0 %v3290
        %3330 = vmatprep.subr.bf16.mxu0 0
        %3331 = vmatpush2.bf16.xpose.msra.mxu0 %v3288
        %3332 = vmatprep.subr.bf16.mxu0 0
        %3333 = vmatpush2.bf16.xpose.msra.mxu0 %v3286
        %3334 = vmatprep.mubr.bf16.mxu0 0
        %3335 = vmatmul.mubr.bf16.gmra.mxu0 %v3268
        %v3336 = vpop.f32.mrf.mxu0
        %v3337 = vadd.f32 %v2467, %v3336
        %v3338 = vpop.f32.mrf.mxu0
        %v3339 = vadd.f32 %v2467, %v3338
        %v3340 = vpop.f32.mrf.mxu0
        %v3341 = vpop.f32.mrf.mxu0
        %3342 = vdwg.mxu0
        %vm3343 = vcmp.ge.f32.partialorder %v3337, 0.0
        %vm3344 = vcmp.ge.f32.partialorder %v3339, 0.0
        %v3345 = vmul.f32 %v3337, 0.01
        %v3346 = vmul.f32 %v3339, 0.01
        %v3347 = vsel %vm3343, %v3337, %v3345
        %v3348 = vsel %vm3344, %v3339, %v3346
        %s3349 = scalar_lea.vmem %s177, 32 [#allocation2]
        %3350 = vst [vmem:[%s3349] sm:$0xff] %v3347
        %3351 = vst [vmem:[%s3349 + $0x8] sm:$0xff] %v3348
        %3352 = vrot.lane.b32.xlu0 %v2698, 4
        %v3353 = vpop.permute.xlu0 %3352
        %3354 = vrot.lane.b32.xlu0 %v2699, 4
        %v3355 = vpop.permute.xlu0 %3354
        %3356 = vrot.lane.b32.xlu0 %v2700, 4
        %v3357 = vpop.permute.xlu0 %3356
        %3358 = vrot.lane.b32.xlu0 %v2701, 4
        %v3359 = vpop.permute.xlu0 %3358
        %3360 = vrot.lane.b32.xlu0 %v2702, 4
        %v3361 = vpop.permute.xlu0 %3360
        %3362 = vrot.lane.b32.xlu0 %v2703, 4
        %v3363 = vpop.permute.xlu0 %3362
        %3364 = vrot.lane.b32.xlu0 %v2704, 4
        %v3365 = vpop.permute.xlu0 %3364
        %3366 = vrot.lane.b32.xlu0 %v2705, 4
        %v3367 = vpop.permute.xlu0 %3366
        %3368 = vrot.lane.b32.xlu0 %v2706, 4
        %v3369 = vpop.permute.xlu0 %3368
        %3370 = vrot.lane.b32.xlu0 %v2707, 4
        %v3371 = vpop.permute.xlu0 %3370
        %3372 = vrot.lane.b32.xlu0 %v2708, 4
        %v3373 = vpop.permute.xlu0 %3372
        %3374 = vrot.lane.b32.xlu0 %v2709, 4
        %v3375 = vpop.permute.xlu0 %3374
        %3376 = vrot.lane.b32.xlu0 %v2710, 4
        %v3377 = vpop.permute.xlu0 %3376
        %3378 = vrot.lane.b32.xlu0 %v2711, 4
        %v3379 = vpop.permute.xlu0 %3378
        %3380 = vrot.lane.b32.xlu0 %v2712, 4
        %v3381 = vpop.permute.xlu0 %3380
        %3382 = vrot.lane.b32.xlu0 %v2713, 4
        %v3383 = vpop.permute.xlu0 %3382
        %3384 = vrot.lane.b32.xlu0 %v3105, 8
        %v3385 = vpop.permute.xlu0 %3384
        %3386 = vrot.lane.b32.xlu0 %v3106, 8
        %v3387 = vpop.permute.xlu0 %3386
        %3388 = vrot.lane.b32.xlu0 %v3107, 8
        %v3389 = vpop.permute.xlu0 %3388
        %3390 = vrot.lane.b32.xlu0 %v3108, 8
        %v3391 = vpop.permute.xlu0 %3390
        %3392 = vrot.lane.b32.xlu0 %v3109, 8
        %v3393 = vpop.permute.xlu0 %3392
        %3394 = vrot.lane.b32.xlu0 %v3110, 8
        %v3395 = vpop.permute.xlu0 %3394
        %3396 = vrot.lane.b32.xlu0 %v3111, 8
        %v3397 = vpop.permute.xlu0 %3396
        %3398 = vrot.lane.b32.xlu0 %v3112, 8
        %v3399 = vpop.permute.xlu0 %3398
        %3400 = vrot.lane.b32.xlu0 %v3113, 8
        %v3401 = vpop.permute.xlu0 %3400
        %3402 = vrot.lane.b32.xlu0 %v3114, 8
        %v3403 = vpop.permute.xlu0 %3402
        %3404 = vrot.lane.b32.xlu0 %v3115, 8
        %v3405 = vpop.permute.xlu0 %3404
        %3406 = vrot.lane.b32.xlu0 %v3116, 8
        %v3407 = vpop.permute.xlu0 %3406
        %3408 = vrot.lane.b32.xlu0 %v3117, 8
        %v3409 = vpop.permute.xlu0 %3408
        %3410 = vrot.lane.b32.xlu0 %v3118, 8
        %v3411 = vpop.permute.xlu0 %3410
        %3412 = vrot.lane.b32.xlu0 %v3119, 8
        %v3413 = vpop.permute.xlu0 %3412
        %3414 = vrot.lane.b32.xlu0 %v3120, 8
        %v3415 = vpop.permute.xlu0 %3414
        %v3416 = vunpack.c.l.b16 %v1918
        %v3417 = vunpack.c.l.b16 %v1921
        %v3418 = vunpack.c.l.b16 %v1925
        %v3419 = vunpack.c.l.b16 %v1928
        %v3420 = vunpack.c.l.b16 %v1932
        %v3421 = vunpack.c.l.b16 %v1935
        %v3422 = vunpack.c.l.b16 %v1939
        %v3423 = vunpack.c.l.b16 %v1942
        %v3424 = vunpack.c.l.b16 %v1946
        %v3425 = vunpack.c.l.b16 %v1949
        %v3426 = vunpack.c.l.b16 %v1953
        %v3427 = vunpack.c.l.b16 %v1956
        %v3428 = vunpack.c.l.b16 %v1960
        %v3429 = vunpack.c.l.b16 %v1963
        %v3430 = vunpack.c.l.b16 %v1967
        %v3431 = vunpack.c.l.b16 %v1970
        %v3432 = vunpack.c.l.b16 %v1974
        %v3433 = vunpack.c.l.b16 %v1977
        %v3434 = vunpack.c.l.b16 %v1981
        %v3435 = vunpack.c.l.b16 %v1984
        %v3436 = vunpack.c.l.b16 %v1988
        %v3437 = vunpack.c.l.b16 %v1991
        %v3438 = vunpack.c.l.b16 %v1995
        %v3439 = vunpack.c.l.b16 %v1998
        %v3440 = vunpack.c.l.b16 %v2002
        %v3441 = vunpack.c.l.b16 %v2005
        %v3442 = vunpack.c.l.b16 %v2009
        %v3443 = vunpack.c.l.b16 %v2012
        %v3444 = vunpack.c.l.b16 %v2016
        %v3445 = vunpack.c.l.b16 %v2019
        %v3446 = vunpack.c.l.b16 %v2023
        %v3447 = vunpack.c.l.b16 %v2026
        %v3448 = vpack.c.b16 %v3417, %v3416
        %v3449 = vpack.c.b16 %v3419, %v3418
        %v3450 = vpack.c.b16 %v3421, %v3420
        %v3451 = vpack.c.b16 %v3423, %v3422
        %v3452 = vpack.c.b16 %v3425, %v3424
        %v3453 = vpack.c.b16 %v3427, %v3426
        %v3454 = vpack.c.b16 %v3429, %v3428
        %v3455 = vpack.c.b16 %v3431, %v3430
        %v3456 = vpack.c.b16 %v3433, %v3432
        %v3457 = vpack.c.b16 %v3435, %v3434
        %v3458 = vpack.c.b16 %v3437, %v3436
        %v3459 = vpack.c.b16 %v3439, %v3438
        %v3460 = vpack.c.b16 %v3441, %v3440
        %v3461 = vpack.c.b16 %v3443, %v3442
        %v3462 = vpack.c.b16 %v3445, %v3444
        %v3463 = vpack.c.b16 %v3447, %v3446
        %3464 = vrot.lane.b32.xlu0 %v3448, 12
        %v3465 = vpop.permute.xlu0 %3464
        %3466 = vrot.lane.b32.xlu0 %v3449, 12
        %v3467 = vpop.permute.xlu0 %3466
        %3468 = vrot.lane.b32.xlu0 %v3450, 12
        %v3469 = vpop.permute.xlu0 %3468
        %3470 = vrot.lane.b32.xlu0 %v3451, 12
        %v3471 = vpop.permute.xlu0 %3470
        %3472 = vrot.lane.b32.xlu0 %v3452, 12
        %v3473 = vpop.permute.xlu0 %3472
        %3474 = vrot.lane.b32.xlu0 %v3453, 12
        %v3475 = vpop.permute.xlu0 %3474
        %3476 = vrot.lane.b32.xlu0 %v3454, 12
        %v3477 = vpop.permute.xlu0 %3476
        %3478 = vrot.lane.b32.xlu0 %v3455, 12
        %v3479 = vpop.permute.xlu0 %3478
        %3480 = vrot.lane.b32.xlu0 %v3456, 12
        %v3481 = vpop.permute.xlu0 %3480
        %3482 = vrot.lane.b32.xlu0 %v3457, 12
        %v3483 = vpop.permute.xlu0 %3482
        %3484 = vrot.lane.b32.xlu0 %v3458, 12
        %v3485 = vpop.permute.xlu0 %3484
        %3486 = vrot.lane.b32.xlu0 %v3459, 12
        %v3487 = vpop.permute.xlu0 %3486
        %3488 = vrot.lane.b32.xlu0 %v3460, 12
        %v3489 = vpop.permute.xlu0 %3488
        %3490 = vrot.lane.b32.xlu0 %v3461, 12
        %v3491 = vpop.permute.xlu0 %3490
        %3492 = vrot.lane.b32.xlu0 %v3462, 12
        %v3493 = vpop.permute.xlu0 %3492
        %3494 = vrot.lane.b32.xlu0 %v3463, 12
        %v3495 = vpop.permute.xlu0 %3494
        %v3498 = vsel %vm2348, %v2300, %v3353
        %v3501 = vsel %vm2348, %v2301, %v3355
        %v3504 = vsel %vm2348, %v2302, %v3357
        %v3507 = vsel %vm2348, %v2303, %v3359
        %v3510 = vsel %vm2348, %v2304, %v3361
        %v3513 = vsel %vm2348, %v2305, %v3363
        %v3516 = vsel %vm2348, %v2306, %v3365
        %v3519 = vsel %vm2348, %v2307, %v3367
        %v3522 = vsel %vm2348, %v2308, %v3369
        %v3525 = vsel %vm2348, %v2309, %v3371
        %v3528 = vsel %vm2348, %v2310, %v3373
        %v3531 = vsel %vm2348, %v2311, %v3375
        %v3534 = vsel %vm2348, %v2312, %v3377
        %v3537 = vsel %vm2348, %v2313, %v3379
        %v3540 = vsel %vm2348, %v2314, %v3381
        %v3543 = vsel %vm2348, %v2315, %v3383
        %v3545 = vsel %vm2397, %v3498, %v3385
        %v3547 = vsel %vm2397, %v3501, %v3387
        %v3549 = vsel %vm2397, %v3504, %v3389
        %v3551 = vsel %vm2397, %v3507, %v3391
        %v3553 = vsel %vm2397, %v3510, %v3393
        %v3555 = vsel %vm2397, %v3513, %v3395
        %v3557 = vsel %vm2397, %v3516, %v3397
        %v3559 = vsel %vm2397, %v3519, %v3399
        %v3561 = vsel %vm2397, %v3522, %v3401
        %v3563 = vsel %vm2397, %v3525, %v3403
        %v3565 = vsel %vm2397, %v3528, %v3405
        %v3567 = vsel %vm2397, %v3531, %v3407
        %v3569 = vsel %vm2397, %v3534, %v3409
        %v3571 = vsel %vm2397, %v3537, %v3411
        %v3573 = vsel %vm2397, %v3540, %v3413
        %v3575 = vsel %vm2397, %v3543, %v3415
        %v3577 = vsel %vm2430, %v3545, %v3465
        %v3579 = vsel %vm2430, %v3547, %v3467
        %v3581 = vsel %vm2430, %v3549, %v3469
        %v3583 = vsel %vm2430, %v3551, %v3471
        %v3585 = vsel %vm2430, %v3553, %v3473
        %v3587 = vsel %vm2430, %v3555, %v3475
        %v3589 = vsel %vm2430, %v3557, %v3477
        %v3591 = vsel %vm2430, %v3559, %v3479
        %v3593 = vsel %vm2430, %v3561, %v3481
        %v3595 = vsel %vm2430, %v3563, %v3483
        %v3597 = vsel %vm2430, %v3565, %v3485
        %v3599 = vsel %vm2430, %v3567, %v3487
        %v3601 = vsel %vm2430, %v3569, %v3489
        %v3603 = vsel %vm2430, %v3571, %v3491
        %v3605 = vsel %vm2430, %v3573, %v3493
        %v3607 = vsel %vm2430, %v3575, %v3495
        %s3608 = scalar_lea.vmem %s1, 12
        %v3609 = vld [vmem:[%s3608] sm:$0xf]
        %v3611 = vsel %vm2469, %v3609, 0
        %v3613 = vsel %vm2469, %v3577, 0
        %v3615 = vsel %vm2469, %v3579, 0
        %v3617 = vsel %vm2469, %v3581, 0
        %v3619 = vsel %vm2469, %v3583, 0
        %v3621 = vsel %vm2469, %v3585, 0
        %v3623 = vsel %vm2469, %v3587, 0
        %v3625 = vsel %vm2469, %v3589, 0
        %v3627 = vsel %vm2469, %v3591, 0
        %v3629 = vsel %vm2469, %v3593, 0
        %v3631 = vsel %vm2469, %v3595, 0
        %v3633 = vsel %vm2469, %v3597, 0
        %v3635 = vsel %vm2469, %v3599, 0
        %v3637 = vsel %vm2469, %v3601, 0
        %v3639 = vsel %vm2469, %v3603, 0
        %v3641 = vsel %vm2469, %v3605, 0
        %v3643 = vsel %vm2469, %v3607, 0
        %3645 = vmatprep.subr.bf16.mxu0 0
        %3646 = vmatpush1.bf16.xpose.msra.mxu0 %v3627
        %3647 = vmatprep.subr.bf16.mxu0 0
        %3648 = vmatpush1.bf16.xpose.msra.mxu0 %v3625
        %3649 = vmatprep.subr.bf16.mxu0 0
        %3650 = vmatpush1.bf16.xpose.msra.mxu0 %v3623
        %3651 = vmatprep.subr.bf16.mxu0 0
        %3652 = vmatpush1.bf16.xpose.msra.mxu0 %v3621
        %3653 = vmatprep.subr.bf16.mxu0 0
        %3654 = vmatpush1.bf16.xpose.msra.mxu0 %v3619
        %3655 = vmatprep.subr.bf16.mxu0 0
        %3656 = vmatpush1.bf16.xpose.msra.mxu0 %v3617
        %3657 = vmatprep.subr.bf16.mxu0 0
        %3658 = vmatpush1.bf16.xpose.msra.mxu0 %v3615
        %3659 = vmatprep.subr.bf16.mxu0 0
        %3660 = vmatpush1.bf16.xpose.msra.mxu0 %v3613
        %3661 = vmatprep.subr.bf16.mxu0 0
        %3662 = vmatpush2.bf16.xpose.msra.mxu0 %v3643
        %3663 = vmatprep.subr.bf16.mxu0 0
        %3664 = vmatpush2.bf16.xpose.msra.mxu0 %v3641
        %3665 = vmatprep.subr.bf16.mxu0 0
        %3666 = vmatpush2.bf16.xpose.msra.mxu0 %v3639
        %3667 = vmatprep.subr.bf16.mxu0 0
        %3668 = vmatpush2.bf16.xpose.msra.mxu0 %v3637
        %3669 = vmatprep.subr.bf16.mxu0 0
        %3670 = vmatpush2.bf16.xpose.msra.mxu0 %v3635
        %3671 = vmatprep.subr.bf16.mxu0 0
        %3672 = vmatpush2.bf16.xpose.msra.mxu0 %v3633
        %3673 = vmatprep.subr.bf16.mxu0 0
        %3674 = vmatpush2.bf16.xpose.msra.mxu0 %v3631
        %3675 = vmatprep.subr.bf16.mxu0 0
        %3676 = vmatpush2.bf16.xpose.msra.mxu0 %v3629
        %3677 = vmatprep.mubr.bf16.mxu0 0
        %3678 = vmatmul.mubr.bf16.gmra.mxu0 %v3611
        %v3679 = vpop.f32.mrf.mxu0
        %v3680 = vadd.f32 %v2467, %v3679
        %v3681 = vpop.f32.mrf.mxu0
        %v3682 = vadd.f32 %v2467, %v3681
        %v3683 = vpop.f32.mrf.mxu0
        %v3684 = vpop.f32.mrf.mxu0
        %3685 = vdwg.mxu0
        %vm3686 = vcmp.ge.f32.partialorder %v3680, 0.0
        %vm3687 = vcmp.ge.f32.partialorder %v3682, 0.0
        %v3688 = vmul.f32 %v3680, 0.01
        %v3689 = vmul.f32 %v3682, 0.01
        %v3690 = vsel %vm3686, %v3680, %v3688
        %v3691 = vsel %vm3687, %v3682, %v3689
        %s3692 = scalar_lea.vmem %s177, 48 [#allocation2]
        %3693 = vst [vmem:[%s3692] sm:$0xff] %v3690
        %3694 = vst [vmem:[%s3692 + $0x8] sm:$0xff] %v3691
        %s3695 = sand.u32 %s107, 1
        %s3696 = scalar_lea.sflag [#allocation3], %s3695
        %s3697 = sand.u32 %s107, 1
        %s3698 = smul.addr %s3697, 64
        %s3699 = scalar_lea.vmem [#allocation2], %s3698
        // Predicated region
        $region33: #{tpu_custom_call.1} parent=31 // pred_check
          %p3700 = pneg %p117
        $region34: #{tpu_custom_call.1} parent=31 // pred_check_branch
          %3702 = sbr.rel (%p3700) target = $region36
        $region35: #{tpu_custom_call.1} parent=31 // pred_region
          %s3703 = smul.u32 2, %s22
          %s3705 = ssub.s32 1024, 1024
          %3706 = vsyncadd %s3696, %s3705
          %s3707 = smul.addr %s21, 2
          %s3708 = sadd.s32 %s3703, %s3707
          %s3709 = smul.addr %s3708, 128
          %s3710 = scalar_lea.hbm %s3, %s3709
          %s3711 = sshll.u32 %s3699, 4
          %s3712 = int_to_ptr.vmem [resolvable:$true] %s3711
          %3717 = dma.vmem_to_hbm [thread:$0]  %s3712, 1024, %s3710, %s3696, 256, 512, 16
        $region36: #{tpu_custom_call.1} parent=31 // pred_fallthru
          _
      $region32: #{tpu_custom_call.1} parent=5 // pred_fallthru
        _
      %p3718 = scmp.le.s32.totalorder 2, %s12
      // Predicated region
      $region37: #{tpu_custom_call.1} parent=5 // pred_check
        %p3719 = pneg %p3718
      $region38: #{tpu_custom_call.1} parent=5 // pred_check_branch
        %3721 = sbr.rel (%p3719) target = $region40
      $region39: #{tpu_custom_call.1} parent=5 // pred_region
        %s3722 = ssub.s32 %s12, 2
        // Predicated region
        $region41: #{tpu_custom_call.1} parent=39 // pred_check
          %p3723 = pneg %p123
        $region42: #{tpu_custom_call.1} parent=39 // pred_check_branch
          %3725 = sbr.rel (%p3723) target = $region44
        $region43: #{tpu_custom_call.1} parent=39 // pred_region
          %s3726 = sand.u32 %s108, 1
          %s3727 = scalar_lea.sflag [#allocation3], %s3726
          %s3728 = sand.u32 %s108, 1
          %s3729 = smul.addr %s3728, 64
          %s3730 = scalar_lea.vmem [#allocation2], %s3729
          %3731 = dma.done %s3727, 1024
        $region44: #{tpu_custom_call.1} parent=39 // pred_fallthru
          _
      $region40: #{tpu_custom_call.1} parent=5 // pred_fallthru
        _
    $region6: #{tpu_custom_call.1} parent=1 // loop_footer
      %s16 = sadd.s32 1, %s12
    $region7: #{tpu_custom_call.1} parent=1 // loop_footer_branch
      %11 = sbr.rel target = $region3
    $region8: #{tpu_custom_call.1} parent=1 // loop_exit
      _
    %3732 = vsyncpa [#allocation3], 1
    %s3733 = scalar_lea.sflag [#allocation3], 1
    %3734 = vsyncpa %s3733, 1

</llo_original>
